<compile_context>
chip_gen: v7x
topology: tpu7x:2x2x1
jax: 0.10.0
libtpu: 0.0.40
codegen_flags: <defaults>
</compile_context>

<pallas_src>
import functools
import math

import jax
import jax.numpy as jnp
from jax.experimental import pallas as pl
from jax.experimental.pallas import tpu as pltpu


def _pose_attention_kernel(
    x_ref, mask_ref,
    wqkv_ref, bqkv_ref, wo_ref, bo_ref, ln_g_ref, ln_b_ref,
    out_ref, probs_ref,
    ctx_ref,
    *, num_heads, head_size, ln_eps,
):
    # Per-step blocks: x_ref [Bb, L, F], mask_ref [Bb, 1, L],
    # wqkv_ref [3F, F] (PyTorch [out,in] layout), bqkv_ref [1, 3F],
    # wo_ref [F, F], bo/gamma/beta [1, F]; ctx_ref is a VMEM f32 scratch [Bb, L, F].
    bb, seq, hidden = x_ref.shape
    cdt = x_ref.dtype                      # native compute dtype for MXU operands
    rows = bb * seq

    x = x_ref[...]                         # [Bb, L, F], native dtype
    x2 = x.reshape(rows, hidden)

    # Fused QKV projection: one MXU matmul against the PyTorch-layout [3F, F] weight
    # (contract the F_in axes directly -> no transpose op; f32 accumulation).
    qkv = jax.lax.dot_general(
        x2, wqkv_ref[...],
        dimension_numbers=(((1,), (1,)), ((), ())),
        preferred_element_type=jnp.float32,
    ) + bqkv_ref[...].astype(jnp.float32)                      # [Bb*L, 3F]

    scale = 1.0 / math.sqrt(head_size)
    # Fold the 1/sqrt(Dh) scale into q once (L*F VPU ops vs H*L*L on the scores).
    q = (qkv[:, :hidden] * scale).astype(cdt).reshape(bb, seq, hidden)
    k = qkv[:, hidden:2 * hidden].astype(cdt).reshape(bb, seq, hidden)
    v = qkv[:, 2 * hidden:].astype(cdt).reshape(bb, seq, hidden)

    # Hoisted additive-mask broadcast (one broadcast per grid step, not per head).
    mask = jnp.broadcast_to(mask_ref[...].astype(jnp.float32), (bb, seq, seq))

    for h in range(num_heads):             # static unroll (small head count)
        lo = h * head_size
        hi = lo + head_size
        q_h = q[:, :, lo:hi]               # [Bb, L, Dh]
        k_h = k[:, :, lo:hi]
        v_h = v[:, :, lo:hi]
        # scores: batched matmul over the batch dim, contracting Dh (no transpose op).
        s_h = jnp.einsum('bqd,bkd->bqk', q_h, k_h,
                         preferred_element_type=jnp.float32)   # [Bb, L, L]
        s_h = s_h + mask
        s_h = s_h - jnp.max(s_h, axis=-1, keepdims=True)
        e_h = jnp.exp(s_h)
        p_h = e_h * pl.reciprocal(jnp.sum(e_h, axis=-1, keepdims=True), approx=False)
        # TODO(synk): attention-probs dropout omitted (eval-mode forward).
        probs_ref[:, h] = p_h.astype(probs_ref.dtype)
        # Write the head context straight into the VMEM scratch accumulator
        # (no lane-axis concatenate at the end).
        ctx_ref[:, :, lo:hi] = jnp.einsum('bqk,bkd->bqd', p_h.astype(cdt), v_h,
                                          preferred_element_type=jnp.float32)

    # Output projection + residual + LayerNorm (TF style: eps inside the sqrt).
    ctx2 = ctx_ref[...].astype(cdt).reshape(rows, hidden)
    proj = jax.lax.dot_general(
        ctx2, wo_ref[...],
        dimension_numbers=(((1,), (1,)), ((), ())),
        preferred_element_type=jnp.float32,
    ) + bo_ref[...].astype(jnp.float32)
    # TODO(synk): hidden-state dropout omitted (eval-mode forward).
    resid = proj + x2.astype(jnp.float32)
    mean = jnp.mean(resid, axis=-1, keepdims=True)
    var = jnp.mean(jnp.square(resid - mean), axis=-1, keepdims=True)
    normed = (resid - mean) * jax.lax.rsqrt(var + ln_eps)
    y = ln_g_ref[...].astype(jnp.float32) * normed + ln_b_ref[...].astype(jnp.float32)
    out_ref[...] = y.reshape(bb, seq, hidden).astype(out_ref.dtype)


def _pick_block_b(batch, seq_len, target_rows=256):
    """Batch elements per grid step: fill the MXU M dim, keep >=2 steps for 2-TC chips."""
    bb = max(1, min(batch, -(-target_rows // seq_len)))
    while bb > 1 and -(-batch // bb) < 2:    # keep at least two grid steps when possible
        bb -= 1
    while batch % bb:                        # block must evenly divide the batch
        bb -= 1
    return bb


def bert_pose_attention(input_tensor, attention_mask, params, *, num_heads,
                        ln_eps=1e-12, block_b=None):
    """input_tensor: [B, T, S, F]; attention_mask: additive mask with B*T*S elements.

    params (PyTorch layouts): wq/wk/wv/wo: [F, F]; bq/bk/bv/bo: [F];
                              ln_gamma/ln_beta: [F].
    Returns (attention_output [B, T, S, F], attention_probs [B, H, T*S, T*S]).
    """
    B, T, S, F = input_tensor.shape
    L = T * S
    head_size = F // num_heads
    dtype = input_tensor.dtype

    if block_b is None:
        block_b = _pick_block_b(B, L)
    assert B % block_b == 0
    num_steps = B // block_b

    # Contiguous reshapes only (metadata, no data movement).
    x = input_tensor.reshape(B, L, F)
    mask = attention_mask.reshape(B, 1, L).astype(dtype)

    # Fuse QKV weights/biases wrapper-side: one [3F, F] weight, one [1, 3F] bias.
    w_qkv = jnp.concatenate([params["wq"], params["wk"], params["wv"]], axis=0)
    b_qkv = jnp.concatenate(
        [params["bq"], params["bk"], params["bv"]], axis=0).reshape(1, 3 * F)
    wo = params["wo"]
    bo = params["bo"].reshape(1, F)
    ln_g = params["ln_gamma"].reshape(1, F)
    ln_b = params["ln_beta"].reshape(1, F)

    kernel = functools.partial(
        _pose_attention_kernel,
        num_heads=num_heads, head_size=head_size, ln_eps=ln_eps)

    const2 = lambda i: (0, 0)        # replicated params (constant block index -> no refetch)
    per_b3 = lambda i: (i, 0, 0)     # per-batch-block arrays

    itemsize = jnp.dtype(dtype).itemsize
    flops = B * (2 * L * F * (3 * F) + 4 * L * L * F + 2 * L * F * F)
    transcendentals = B * (num_heads * L * L + num_heads * L + L)
    bytes_accessed = itemsize * (
        2 * B * L * F + B * L + 4 * F * F + 8 * F + B * num_heads * L * L)

    # VMEM budget estimate: double-buffered per-step blocks + replicated params + scratch.
    block_bytes = itemsize * (2 * block_b * L * F + block_b * L
                              + block_b * num_heads * L * L)
    param_bytes = itemsize * (4 * F * F + 6 * F)
    scratch_bytes = 4 * block_b * L * F
    est = 2 * (block_bytes + param_bytes) + scratch_bytes
    vmem_limit = int(min(max(est + (8 << 20), 32 << 20), 48 << 20))

    out, probs = pl.pallas_call(
        kernel,
        out_shape=(
            jax.ShapeDtypeStruct((B, L, F), dtype),
            jax.ShapeDtypeStruct((B, num_heads, L, L), dtype),
        ),
        grid_spec=pltpu.PrefetchScalarGridSpec(
            num_scalar_prefetch=0,
            grid=(num_steps,),
            in_specs=[
                pl.BlockSpec((block_b, L, F), per_b3),      # hidden states (also residual)
                pl.BlockSpec((block_b, 1, L), per_b3),      # additive attention mask
                pl.BlockSpec((3 * F, F), const2),           # fused Wqkv (PyTorch [out, in])
                pl.BlockSpec((1, 3 * F), const2),           # fused bqkv
                pl.BlockSpec((F, F), const2),               # Wo
                pl.BlockSpec((1, F), const2),               # bo
                pl.BlockSpec((1, F), const2),               # LayerNorm gamma
                pl.BlockSpec((1, F), const2),               # LayerNorm beta
            ],
            out_specs=[
                pl.BlockSpec((block_b, L, F), per_b3),
                pl.BlockSpec((block_b, num_heads, L, L), lambda i: (i, 0, 0, 0)),
            ],
            scratch_shapes=[pltpu.VMEM((block_b, L, F), jnp.float32)],
        ),
        compiler_params=pltpu.CompilerParams(
            dimension_semantics=("parallel",),              # shard batch grid across TCs
            vmem_limit_bytes=vmem_limit,
        ),
        cost_estimate=pl.CostEstimate(
            flops=flops,
            transcendentals=transcendentals,
            bytes_accessed=bytes_accessed,
        ),
    )(x, mask, w_qkv, b_qkv, wo, bo, ln_g, ln_b)

    return out.reshape(B, T, S, F), probs


def _reference(input_tensor, attention_mask, params, *, num_heads, ln_eps=1e-12):
    """Pure-JAX reimplementation of the PyTorch forward (eval mode)."""
    B, T, S, F = input_tensor.shape
    L = T * S
    Dh = F // num_heads
    x = input_tensor.reshape(B, L, F)
    mask = attention_mask.reshape(B, 1, 1, L)

    def lin(w, b):
        return x @ w.T + b

    def split(t):
        return t.reshape(B, L, num_heads, Dh).transpose(0, 2, 1, 3)

    qh = split(lin(params["wq"], params["bq"]))
    kh = split(lin(params["wk"], params["bk"]))
    vh = split(lin(params["wv"], params["bv"]))
    scores = jnp.einsum("bhld,bhmd->bhlm", qh, kh) / math.sqrt(Dh) + mask
    probs = jax.nn.softmax(scores, axis=-1)
    ctx = jnp.einsum("bhlm,bhmd->bhld", probs, vh)
    ctx = ctx.transpose(0, 2, 1, 3).reshape(B, L, F)
    proj = ctx @ params["wo"].T + params["bo"]
    resid = proj + x
    u = resid.mean(-1, keepdims=True)
    s = ((resid - u) ** 2).mean(-1, keepdims=True)
    normed = (resid - u) / jnp.sqrt(s + ln_eps)
    y = params["ln_gamma"] * normed + params["ln_beta"]
    return y.reshape(B, T, S, F), probs


if __name__ == "__main__":
    # Small config consistent with the module: v_hidden_size=32, 4 heads (head_size=8),
    # batch=2, image "tokens" T x S = 2 x 4 -> seq len 8.
    B, T, S = 2, 2, 4
    V_HIDDEN, NUM_HEADS = 32, 4
    L = T * S

    key = jax.random.PRNGKey(0)
    ks = jax.random.split(key, 11)

    input_tensor = jax.random.normal(ks[0], (B, T, S, V_HIDDEN), dtype=jnp.float32)
    # BERT-style additive mask (0 = attend, -10000 = masked), viewable to [B, 1, 1, T*S].
    attention_mask = jnp.zeros((B, T, S), jnp.float32).at[:, -1, -1].set(-10000.0)

    def w(k):
        return jax.random.normal(k, (V_HIDDEN, V_HIDDEN), jnp.float32) * 0.05

    def b(k):
        return jax.random.normal(k, (V_HIDDEN,), jnp.float32) * 0.02

    params = {
        "wq": w(ks[1]), "bq": b(ks[2]),
        "wk": w(ks[3]), "bk": b(ks[4]),
        "wv": w(ks[5]), "bv": b(ks[6]),
        "wo": w(ks[7]), "bo": b(ks[8]),
        "ln_gamma": 1.0 + 0.05 * jax.random.normal(ks[9], (V_HIDDEN,), jnp.float32),
        "ln_beta": 0.05 * jax.random.normal(ks[10], (V_HIDDEN,), jnp.float32),
    }

    out, probs = bert_pose_attention(
        input_tensor, attention_mask, params, num_heads=NUM_HEADS)
    out, probs = jax.block_until_ready((out, probs))

    ref_out, ref_probs = _reference(
        input_tensor, attention_mask, params, num_heads=NUM_HEADS)

    assert out.shape == (B, T, S, V_HIDDEN)
    assert probs.shape == (B, NUM_HEADS, L, L)
    assert jnp.allclose(out, ref_out, atol=1e-4, rtol=1e-4)
    assert jnp.allclose(probs, ref_probs, atol=1e-5, rtol=1e-5)

    print("KERNEL_OK")
</pallas_src>

<mosaic_0001>
module attributes {stable_mosaic.version = 11 : i64} {
  func.func @_pose_attention_kernel(%arg0: i32, %arg1: memref<1x8x32xf32, #tpu.memory_space<vmem>>, %arg2: memref<1x1x8xf32, #tpu.memory_space<vmem>>, %arg3: memref<96x32xf32, #tpu.memory_space<vmem>>, %arg4: memref<1x96xf32, #tpu.memory_space<vmem>>, %arg5: memref<32x32xf32, #tpu.memory_space<vmem>>, %arg6: memref<1x32xf32, #tpu.memory_space<vmem>>, %arg7: memref<1x32xf32, #tpu.memory_space<vmem>>, %arg8: memref<1x32xf32, #tpu.memory_space<vmem>>, %arg9: memref<1x8x32xf32, #tpu.memory_space<vmem>>, %arg10: memref<1x4x8x8xf32, #tpu.memory_space<vmem>>, %arg11: memref<1x8x32xf32, #tpu.memory_space<vmem>>) attributes {dimension_semantics = [#tpu.dimension_semantics<parallel>], iteration_bounds = array<i64: 2>, scalar_prefetch = 0 : i64, scratch_operands = 1 : i64, tpu.core_type = #tpu.core_type<tc>, window_params = [{transform_indices = @transform_0, window_bounds = array<i64: 1, 8, 32>}, {transform_indices = @transform_1, window_bounds = array<i64: 1, 1, 8>}, {pipeline_mode = #tpu.pipeline_mode<synchronous>, transform_indices = @transform_2, window_bounds = array<i64: 96, 32>}, {pipeline_mode = #tpu.pipeline_mode<synchronous>, transform_indices = @transform_3, window_bounds = array<i64: 1, 96>}, {pipeline_mode = #tpu.pipeline_mode<synchronous>, transform_indices = @transform_4, window_bounds = array<i64: 32, 32>}, {pipeline_mode = #tpu.pipeline_mode<synchronous>, transform_indices = @transform_5, window_bounds = array<i64: 1, 32>}, {pipeline_mode = #tpu.pipeline_mode<synchronous>, transform_indices = @transform_6, window_bounds = array<i64: 1, 32>}, {pipeline_mode = #tpu.pipeline_mode<synchronous>, transform_indices = @transform_7, window_bounds = array<i64: 1, 32>}, {transform_indices = @transform_8, window_bounds = array<i64: 1, 8, 32>}, {transform_indices = @transform_9, window_bounds = array<i64: 1, 4, 8, 8>}]} {
    %c0 = arith.constant 0 : index
    %c0_0 = arith.constant 0 : index
    %c0_1 = arith.constant 0 : index
    %0 = vector.load %arg1[%c0, %c0_0, %c0_1] : memref<1x8x32xf32, #tpu.memory_space<vmem>>, vector<1x8x32xf32>
    %1 = vector.shape_cast %0 : vector<1x8x32xf32> to vector<8x32xf32>
    %c0_2 = arith.constant 0 : index
    %c0_3 = arith.constant 0 : index
    %2 = vector.load %arg3[%c0_2, %c0_3] : memref<96x32xf32, #tpu.memory_space<vmem>>, vector<96x32xf32>
    %cst = arith.constant dense<0.000000e+00> : vector<8x96xf32>
    %3 = tpu.matmul %1, %2, %cst {dimension_numbers = #tpu.dot_dimension_numbers<[1], [1], [0], [0], [0, 0, 1, 0], [], []>} : vector<8x32xf32>, vector<96x32xf32>, vector<8x96xf32> -> vector<8x96xf32>
    %c0_4 = arith.constant 0 : index
    %c0_5 = arith.constant 0 : index
    %4 = vector.load %arg4[%c0_4, %c0_5] : memref<1x96xf32, #tpu.memory_space<vmem>>, vector<1x96xf32>
    %5 = vector.broadcast %4 : vector<1x96xf32> to vector<8x96xf32>
    %6 = arith.addf %3, %5 : vector<8x96xf32>
    %7 = vector.extract_strided_slice %6 {offsets = [0, 0], sizes = [8, 32], strides = [1, 1]} : vector<8x96xf32> to vector<8x32xf32>
    %cst_6 = arith.constant 0.353553385 : f32
    %8 = vector.broadcast %cst_6 : f32 to vector<8x32xf32>
    %9 = arith.mulf %7, %8 : vector<8x32xf32>
    %10 = vector.shape_cast %9 : vector<8x32xf32> to vector<1x8x32xf32>
    %11 = vector.extract_strided_slice %6 {offsets = [0, 32], sizes = [8, 32], strides = [1, 1]} : vector<8x96xf32> to vector<8x32xf32>
    %12 = vector.shape_cast %11 : vector<8x32xf32> to vector<1x8x32xf32>
    %13 = vector.extract_strided_slice %6 {offsets = [0, 64], sizes = [8, 32], strides = [1, 1]} : vector<8x96xf32> to vector<8x32xf32>
    %14 = vector.shape_cast %13 : vector<8x32xf32> to vector<1x8x32xf32>
    %c0_7 = arith.constant 0 : index
    %c0_8 = arith.constant 0 : index
    %c0_9 = arith.constant 0 : index
    %15 = vector.load %arg2[%c0_7, %c0_8, %c0_9] : memref<1x1x8xf32, #tpu.memory_space<vmem>>, vector<1x1x8xf32>
    %16 = vector.shape_cast %15 : vector<1x1x8xf32> to vector<1x1x8xf32>
    %17 = vector.broadcast %16 : vector<1x1x8xf32> to vector<1x8x8xf32>
    %18 = vector.extract_strided_slice %10 {offsets = [0, 0, 0], sizes = [1, 8, 8], strides = [1, 1, 1]} : vector<1x8x32xf32> to vector<1x8x8xf32>
    %19 = vector.extract_strided_slice %12 {offsets = [0, 0, 0], sizes = [1, 8, 8], strides = [1, 1, 1]} : vector<1x8x32xf32> to vector<1x8x8xf32>
    %20 = vector.extract_strided_slice %14 {offsets = [0, 0, 0], sizes = [1, 8, 8], strides = [1, 1, 1]} : vector<1x8x32xf32> to vector<1x8x8xf32>
    "tpu.trace_start"() <{level = 10 : i32, message = "bqd,bkd->bqk"}> : () -> ()
    %cst_10 = arith.constant dense<0.000000e+00> : vector<1x8x8xf32>
    %21 = tpu.matmul %18, %19, %cst_10 {dimension_numbers = #tpu.dot_dimension_numbers<[2], [2], [1], [1], [0, 0, 0, 1, 1, 1], [0], [0]>} : vector<1x8x8xf32>, vector<1x8x8xf32>, vector<1x8x8xf32> -> vector<1x8x8xf32>
    "tpu.trace_stop"() : () -> ()
    %22 = arith.addf %21, %17 : vector<1x8x8xf32>
    %cst_11 = arith.constant dense<0xFF800000> : vector<1x8xf32>
    %23 = vector.multi_reduction <maximumf>, %22, %cst_11 [2] : vector<1x8x8xf32> to vector<1x8xf32>
    %24 = vector.shape_cast %23 : vector<1x8xf32> to vector<1x8x1xf32>
    %25 = vector.broadcast %24 : vector<1x8x1xf32> to vector<1x8x8xf32>
    %26 = arith.subf %22, %25 : vector<1x8x8xf32>
    %27 = math.exp %26 : vector<1x8x8xf32>
    %cst_12 = arith.constant dense<0.000000e+00> : vector<1x8xf32>
    %28 = vector.multi_reduction <add>, %27, %cst_12 [2] : vector<1x8x8xf32> to vector<1x8xf32>
    %29 = vector.shape_cast %28 : vector<1x8xf32> to vector<1x8x1xf32>
    %30 = tpu.reciprocal %29 : vector<1x8x1xf32> -> vector<1x8x1xf32>
    %31 = vector.broadcast %30 : vector<1x8x1xf32> to vector<1x8x8xf32>
    %32 = arith.mulf %27, %31 : vector<1x8x8xf32>
    %c0_13 = arith.constant 0 : index
    %c0_14 = arith.constant 0 : index
    %c0_15 = arith.constant 0 : index
    %c0_16 = arith.constant 0 : index
    %33 = vector.load %arg10[%c0_13, %c0_14, %c0_15, %c0_16] : memref<1x4x8x8xf32, #tpu.memory_space<vmem>>, vector<1x1x8x8xf32>
    %34 = vector.shape_cast %33 : vector<1x1x8x8xf32> to vector<1x8x8xf32>
    %35 = vector.shape_cast %32 : vector<1x8x8xf32> to vector<1x1x8x8xf32>
    tpu.vector_store %arg10[%c0_13, %c0_14, %c0_15, %c0_16], %35 {strides = array<i32>} : memref<1x4x8x8xf32, #tpu.memory_space<vmem>>, vector<1x1x8x8xf32>,
    "tpu.trace_start"() <{level = 10 : i32, message = "bqk,bkd->bqd"}> : () -> ()
    %cst_17 = arith.constant dense<0.000000e+00> : vector<1x8x8xf32>
    %36 = tpu.matmul %32, %20, %cst_17 {dimension_numbers = #tpu.dot_dimension_numbers<[2], [1], [1], [2], [0, 0, 0, 1, 1, 2], [0], [0]>} : vector<1x8x8xf32>, vector<1x8x8xf32>, vector<1x8x8xf32> -> vector<1x8x8xf32>
    "tpu.trace_stop"() : () -> ()
    %c0_18 = arith.constant 0 : index
    %c0_19 = arith.constant 0 : index
    %c0_20 = arith.constant 0 : index
    %37 = vector.load %arg11[%c0_18, %c0_19, %c0_20] : memref<1x8x32xf32, #tpu.memory_space<vmem>>, vector<1x8x8xf32>
    tpu.vector_store %arg11[%c0_18, %c0_19, %c0_20], %36 {strides = array<i32>} : memref<1x8x32xf32, #tpu.memory_space<vmem>>, vector<1x8x8xf32>,
    %38 = vector.extract_strided_slice %10 {offsets = [0, 0, 8], sizes = [1, 8, 8], strides = [1, 1, 1]} : vector<1x8x32xf32> to vector<1x8x8xf32>
    %39 = vector.extract_strided_slice %12 {offsets = [0, 0, 8], sizes = [1, 8, 8], strides = [1, 1, 1]} : vector<1x8x32xf32> to vector<1x8x8xf32>
    %40 = vector.extract_strided_slice %14 {offsets = [0, 0, 8], sizes = [1, 8, 8], strides = [1, 1, 1]} : vector<1x8x32xf32> to vector<1x8x8xf32>
    "tpu.trace_start"() <{level = 10 : i32, message = "bqd,bkd->bqk"}> : () -> ()
    %cst_21 = arith.constant dense<0.000000e+00> : vector<1x8x8xf32>
    %41 = tpu.matmul %38, %39, %cst_21 {dimension_numbers = #tpu.dot_dimension_numbers<[2], [2], [1], [1], [0, 0, 0, 1, 1, 1], [0], [0]>} : vector<1x8x8xf32>, vector<1x8x8xf32>, vector<1x8x8xf32> -> vector<1x8x8xf32>
    "tpu.trace_stop"() : () -> ()
    %42 = arith.addf %41, %17 : vector<1x8x8xf32>
    %cst_22 = arith.constant dense<0xFF800000> : vector<1x8xf32>
    %43 = vector.multi_reduction <maximumf>, %42, %cst_22 [2] : vector<1x8x8xf32> to vector<1x8xf32>
    %44 = vector.shape_cast %43 : vector<1x8xf32> to vector<1x8x1xf32>
    %45 = vector.broadcast %44 : vector<1x8x1xf32> to vector<1x8x8xf32>
    %46 = arith.subf %42, %45 : vector<1x8x8xf32>
    %47 = math.exp %46 : vector<1x8x8xf32>
    %cst_23 = arith.constant dense<0.000000e+00> : vector<1x8xf32>
    %48 = vector.multi_reduction <add>, %47, %cst_23 [2] : vector<1x8x8xf32> to vector<1x8xf32>
    %49 = vector.shape_cast %48 : vector<1x8xf32> to vector<1x8x1xf32>
    %50 = tpu.reciprocal %49 : vector<1x8x1xf32> -> vector<1x8x1xf32>
    %51 = vector.broadcast %50 : vector<1x8x1xf32> to vector<1x8x8xf32>
    %52 = arith.mulf %47, %51 : vector<1x8x8xf32>
    %c0_24 = arith.constant 0 : index
    %c1 = arith.constant 1 : index
    %c0_25 = arith.constant 0 : index
    %c0_26 = arith.constant 0 : index
    %53 = vector.load %arg10[%c0_24, %c1, %c0_25, %c0_26] : memref<1x4x8x8xf32, #tpu.memory_space<vmem>>, vector<1x1x8x8xf32>
    %54 = vector.shape_cast %53 : vector<1x1x8x8xf32> to vector<1x8x8xf32>
    %55 = vector.shape_cast %52 : vector<1x8x8xf32> to vector<1x1x8x8xf32>
    tpu.vector_store %arg10[%c0_24, %c1, %c0_25, %c0_26], %55 {strides = array<i32>} : memref<1x4x8x8xf32, #tpu.memory_space<vmem>>, vector<1x1x8x8xf32>,
    "tpu.trace_start"() <{level = 10 : i32, message = "bqk,bkd->bqd"}> : () -> ()
    %cst_27 = arith.constant dense<0.000000e+00> : vector<1x8x8xf32>
    %56 = tpu.matmul %52, %40, %cst_27 {dimension_numbers = #tpu.dot_dimension_numbers<[2], [1], [1], [2], [0, 0, 0, 1, 1, 2], [0], [0]>} : vector<1x8x8xf32>, vector<1x8x8xf32>, vector<1x8x8xf32> -> vector<1x8x8xf32>
    "tpu.trace_stop"() : () -> ()
    %c0_28 = arith.constant 0 : index
    %c0_29 = arith.constant 0 : index
    %c8 = arith.constant 8 : index
    %57 = vector.load %arg11[%c0_28, %c0_29, %c8] : memref<1x8x32xf32, #tpu.memory_space<vmem>>, vector<1x8x8xf32>
    tpu.vector_store %arg11[%c0_28, %c0_29, %c8], %56 {strides = array<i32>} : memref<1x8x32xf32, #tpu.memory_space<vmem>>, vector<1x8x8xf32>,
    %58 = vector.extract_strided_slice %10 {offsets = [0, 0, 16], sizes = [1, 8, 8], strides = [1, 1, 1]} : vector<1x8x32xf32> to vector<1x8x8xf32>
    %59 = vector.extract_strided_slice %12 {offsets = [0, 0, 16], sizes = [1, 8, 8], strides = [1, 1, 1]} : vector<1x8x32xf32> to vector<1x8x8xf32>
    %60 = vector.extract_strided_slice %14 {offsets = [0, 0, 16], sizes = [1, 8, 8], strides = [1, 1, 1]} : vector<1x8x32xf32> to vector<1x8x8xf32>
    "tpu.trace_start"() <{level = 10 : i32, message = "bqd,bkd->bqk"}> : () -> ()
    %cst_30 = arith.constant dense<0.000000e+00> : vector<1x8x8xf32>
    %61 = tpu.matmul %58, %59, %cst_30 {dimension_numbers = #tpu.dot_dimension_numbers<[2], [2], [1], [1], [0, 0, 0, 1, 1, 1], [0], [0]>} : vector<1x8x8xf32>, vector<1x8x8xf32>, vector<1x8x8xf32> -> vector<1x8x8xf32>
    "tpu.trace_stop"() : () -> ()
    %62 = arith.addf %61, %17 : vector<1x8x8xf32>
    %cst_31 = arith.constant dense<0xFF800000> : vector<1x8xf32>
    %63 = vector.multi_reduction <maximumf>, %62, %cst_31 [2] : vector<1x8x8xf32> to vector<1x8xf32>
    %64 = vector.shape_cast %63 : vector<1x8xf32> to vector<1x8x1xf32>
    %65 = vector.broadcast %64 : vector<1x8x1xf32> to vector<1x8x8xf32>
    %66 = arith.subf %62, %65 : vector<1x8x8xf32>
    %67 = math.exp %66 : vector<1x8x8xf32>
    %cst_32 = arith.constant dense<0.000000e+00> : vector<1x8xf32>
    %68 = vector.multi_reduction <add>, %67, %cst_32 [2] : vector<1x8x8xf32> to vector<1x8xf32>
    %69 = vector.shape_cast %68 : vector<1x8xf32> to vector<1x8x1xf32>
    %70 = tpu.reciprocal %69 : vector<1x8x1xf32> -> vector<1x8x1xf32>
    %71 = vector.broadcast %70 : vector<1x8x1xf32> to vector<1x8x8xf32>
    %72 = arith.mulf %67, %71 : vector<1x8x8xf32>
    %c0_33 = arith.constant 0 : index
    %c2 = arith.constant 2 : index
    %c0_34 = arith.constant 0 : index
    %c0_35 = arith.constant 0 : index
    %73 = vector.load %arg10[%c0_33, %c2, %c0_34, %c0_35] : memref<1x4x8x8xf32, #tpu.memory_space<vmem>>, vector<1x1x8x8xf32>
    %74 = vector.shape_cast %73 : vector<1x1x8x8xf32> to vector<1x8x8xf32>
    %75 = vector.shape_cast %72 : vector<1x8x8xf32> to vector<1x1x8x8xf32>
    tpu.vector_store %arg10[%c0_33, %c2, %c0_34, %c0_35], %75 {strides = array<i32>} : memref<1x4x8x8xf32, #tpu.memory_space<vmem>>, vector<1x1x8x8xf32>,
    "tpu.trace_start"() <{level = 10 : i32, message = "bqk,bkd->bqd"}> : () -> ()
    %cst_36 = arith.constant dense<0.000000e+00> : vector<1x8x8xf32>
    %76 = tpu.matmul %72, %60, %cst_36 {dimension_numbers = #tpu.dot_dimension_numbers<[2], [1], [1], [2], [0, 0, 0, 1, 1, 2], [0], [0]>} : vector<1x8x8xf32>, vector<1x8x8xf32>, vector<1x8x8xf32> -> vector<1x8x8xf32>
    "tpu.trace_stop"() : () -> ()
    %c0_37 = arith.constant 0 : index
    %c0_38 = arith.constant 0 : index
    %c16 = arith.constant 16 : index
    %77 = vector.load %arg11[%c0_37, %c0_38, %c16] : memref<1x8x32xf32, #tpu.memory_space<vmem>>, vector<1x8x8xf32>
    tpu.vector_store %arg11[%c0_37, %c0_38, %c16], %76 {strides = array<i32>} : memref<1x8x32xf32, #tpu.memory_space<vmem>>, vector<1x8x8xf32>,
    %78 = vector.extract_strided_slice %10 {offsets = [0, 0, 24], sizes = [1, 8, 8], strides = [1, 1, 1]} : vector<1x8x32xf32> to vector<1x8x8xf32>
    %79 = vector.extract_strided_slice %12 {offsets = [0, 0, 24], sizes = [1, 8, 8], strides = [1, 1, 1]} : vector<1x8x32xf32> to vector<1x8x8xf32>
    %80 = vector.extract_strided_slice %14 {offsets = [0, 0, 24], sizes = [1, 8, 8], strides = [1, 1, 1]} : vector<1x8x32xf32> to vector<1x8x8xf32>
    "tpu.trace_start"() <{level = 10 : i32, message = "bqd,bkd->bqk"}> : () -> ()
    %cst_39 = arith.constant dense<0.000000e+00> : vector<1x8x8xf32>
    %81 = tpu.matmul %78, %79, %cst_39 {dimension_numbers = #tpu.dot_dimension_numbers<[2], [2], [1], [1], [0, 0, 0, 1, 1, 1], [0], [0]>} : vector<1x8x8xf32>, vector<1x8x8xf32>, vector<1x8x8xf32> -> vector<1x8x8xf32>
    "tpu.trace_stop"() : () -> ()
    %82 = arith.addf %81, %17 : vector<1x8x8xf32>
    %cst_40 = arith.constant dense<0xFF800000> : vector<1x8xf32>
    %83 = vector.multi_reduction <maximumf>, %82, %cst_40 [2] : vector<1x8x8xf32> to vector<1x8xf32>
    %84 = vector.shape_cast %83 : vector<1x8xf32> to vector<1x8x1xf32>
    %85 = vector.broadcast %84 : vector<1x8x1xf32> to vector<1x8x8xf32>
    %86 = arith.subf %82, %85 : vector<1x8x8xf32>
    %87 = math.exp %86 : vector<1x8x8xf32>
    %cst_41 = arith.constant dense<0.000000e+00> : vector<1x8xf32>
    %88 = vector.multi_reduction <add>, %87, %cst_41 [2] : vector<1x8x8xf32> to vector<1x8xf32>
    %89 = vector.shape_cast %88 : vector<1x8xf32> to vector<1x8x1xf32>
    %90 = tpu.reciprocal %89 : vector<1x8x1xf32> -> vector<1x8x1xf32>
    %91 = vector.broadcast %90 : vector<1x8x1xf32> to vector<1x8x8xf32>
    %92 = arith.mulf %87, %91 : vector<1x8x8xf32>
    %c0_42 = arith.constant 0 : index
    %c3 = arith.constant 3 : index
    %c0_43 = arith.constant 0 : index
    %c0_44 = arith.constant 0 : index
    %93 = vector.load %arg10[%c0_42, %c3, %c0_43, %c0_44] : memref<1x4x8x8xf32, #tpu.memory_space<vmem>>, vector<1x1x8x8xf32>
    %94 = vector.shape_cast %93 : vector<1x1x8x8xf32> to vector<1x8x8xf32>
    %95 = vector.shape_cast %92 : vector<1x8x8xf32> to vector<1x1x8x8xf32>
    tpu.vector_store %arg10[%c0_42, %c3, %c0_43, %c0_44], %95 {strides = array<i32>} : memref<1x4x8x8xf32, #tpu.memory_space<vmem>>, vector<1x1x8x8xf32>,
    "tpu.trace_start"() <{level = 10 : i32, message = "bqk,bkd->bqd"}> : () -> ()
    %cst_45 = arith.constant dense<0.000000e+00> : vector<1x8x8xf32>
    %96 = tpu.matmul %92, %80, %cst_45 {dimension_numbers = #tpu.dot_dimension_numbers<[2], [1], [1], [2], [0, 0, 0, 1, 1, 2], [0], [0]>} : vector<1x8x8xf32>, vector<1x8x8xf32>, vector<1x8x8xf32> -> vector<1x8x8xf32>
    "tpu.trace_stop"() : () -> ()
    %c0_46 = arith.constant 0 : index
    %c0_47 = arith.constant 0 : index
    %c24 = arith.constant 24 : index
    %97 = vector.load %arg11[%c0_46, %c0_47, %c24] : memref<1x8x32xf32, #tpu.memory_space<vmem>>, vector<1x8x8xf32>
    tpu.vector_store %arg11[%c0_46, %c0_47, %c24], %96 {strides = array<i32>} : memref<1x8x32xf32, #tpu.memory_space<vmem>>, vector<1x8x8xf32>,
    %c0_48 = arith.constant 0 : index
    %c0_49 = arith.constant 0 : index
    %c0_50 = arith.constant 0 : index
    %98 = vector.load %arg11[%c0_48, %c0_49, %c0_50] : memref<1x8x32xf32, #tpu.memory_space<vmem>>, vector<1x8x32xf32>
    %99 = vector.shape_cast %98 : vector<1x8x32xf32> to vector<8x32xf32>
    %c0_51 = arith.constant 0 : index
    %c0_52 = arith.constant 0 : index
    %100 = vector.load %arg5[%c0_51, %c0_52] : memref<32x32xf32, #tpu.memory_space<vmem>>, vector<32x32xf32>
    %cst_53 = arith.constant dense<0.000000e+00> : vector<8x32xf32>
    %101 = tpu.matmul %99, %100, %cst_53 {dimension_numbers = #tpu.dot_dimension_numbers<[1], [1], [0], [0], [0, 0, 1, 0], [], []>} : vector<8x32xf32>, vector<32x32xf32>, vector<8x32xf32> -> vector<8x32xf32>
    %c0_54 = arith.constant 0 : index
    %c0_55 = arith.constant 0 : index
    %102 = vector.load %arg6[%c0_54, %c0_55] : memref<1x32xf32, #tpu.memory_space<vmem>>, vector<1x32xf32>
    %103 = vector.broadcast %102 : vector<1x32xf32> to vector<8x32xf32>
    %104 = arith.addf %101, %103 : vector<8x32xf32>
    %105 = arith.addf %104, %1 : vector<8x32xf32>
    %cst_56 = arith.constant dense<0.000000e+00> : vector<8xf32>
    %106 = vector.multi_reduction <add>, %105, %cst_56 [1] : vector<8x32xf32> to vector<8xf32>
    %107 = vector.shape_cast %106 : vector<8xf32> to vector<8x1xf32>
    %cst_57 = arith.constant 3.200000e+01 : f32
    %108 = vector.broadcast %cst_57 : f32 to vector<8x1xf32>
    %109 = arith.divf %107, %108 : vector<8x1xf32>
    %110 = vector.broadcast %109 : vector<8x1xf32> to vector<8x32xf32>
    %111 = arith.subf %105, %110 : vector<8x32xf32>
    %112 = arith.mulf %111, %111 : vector<8x32xf32>
    %cst_58 = arith.constant dense<0.000000e+00> : vector<8xf32>
    %113 = vector.multi_reduction <add>, %112, %cst_58 [1] : vector<8x32xf32> to vector<8xf32>
    %114 = vector.shape_cast %113 : vector<8xf32> to vector<8x1xf32>
    %cst_59 = arith.constant 3.200000e+01 : f32
    %115 = vector.broadcast %cst_59 : f32 to vector<8x1xf32>
    %116 = arith.divf %114, %115 : vector<8x1xf32>
    %117 = vector.broadcast %109 : vector<8x1xf32> to vector<8x32xf32>
    %118 = arith.subf %105, %117 : vector<8x32xf32>
    %cst_60 = arith.constant 9.99999996E-13 : f32
    %119 = vector.broadcast %cst_60 : f32 to vector<8x1xf32>
    %120 = arith.addf %116, %119 : vector<8x1xf32>
    %121 = math.rsqrt %120 : vector<8x1xf32>
    %122 = vector.broadcast %121 : vector<8x1xf32> to vector<8x32xf32>
    %123 = arith.mulf %118, %122 : vector<8x32xf32>
    %c0_61 = arith.constant 0 : index
    %c0_62 = arith.constant 0 : index
    %124 = vector.load %arg7[%c0_61, %c0_62] : memref<1x32xf32, #tpu.memory_space<vmem>>, vector<1x32xf32>
    %125 = vector.broadcast %124 : vector<1x32xf32> to vector<8x32xf32>
    %126 = arith.mulf %125, %123 : vector<8x32xf32>
    %c0_63 = arith.constant 0 : index
    %c0_64 = arith.constant 0 : index
    %127 = vector.load %arg8[%c0_63, %c0_64] : memref<1x32xf32, #tpu.memory_space<vmem>>, vector<1x32xf32>
    %128 = vector.broadcast %127 : vector<1x32xf32> to vector<8x32xf32>
    %129 = arith.addf %126, %128 : vector<8x32xf32>
    %130 = vector.shape_cast %129 : vector<8x32xf32> to vector<1x8x32xf32>
    %c0_65 = arith.constant 0 : index
    %c0_66 = arith.constant 0 : index
    %c0_67 = arith.constant 0 : index
    %131 = vector.load %arg9[%c0_65, %c0_66, %c0_67] : memref<1x8x32xf32, #tpu.memory_space<vmem>>, vector<1x8x32xf32>
    tpu.vector_store %arg9[%c0_65, %c0_66, %c0_67], %130 {strides = array<i32>} : memref<1x8x32xf32, #tpu.memory_space<vmem>>, vector<1x8x32xf32>,
    return
  }
  func.func @transform_0(%arg0: i32) -> (i32, i32, i32) {
    %c0_i32 = arith.constant 0 : i32
    %c0_i32_0 = arith.constant 0 : i32
    %c0_i32_1 = arith.constant 0 : i32
    return %arg0, %c0_i32, %c0_i32_0 : i32, i32, i32
  }
  func.func @transform_1(%arg0: i32) -> (i32, i32, i32) {
    %c0_i32 = arith.constant 0 : i32
    %c0_i32_0 = arith.constant 0 : i32
    %c0_i32_1 = arith.constant 0 : i32
    return %arg0, %c0_i32, %c0_i32_0 : i32, i32, i32
  }
  func.func @transform_2(%arg0: i32) -> (i32, i32) {
    %c0_i32 = arith.constant 0 : i32
    %c0_i32_0 = arith.constant 0 : i32
    %c0_i32_1 = arith.constant 0 : i32
    return %c0_i32, %c0_i32_0 : i32, i32
  }
  func.func @transform_3(%arg0: i32) -> (i32, i32) {
    %c0_i32 = arith.constant 0 : i32
    %c0_i32_0 = arith.constant 0 : i32
    %c0_i32_1 = arith.constant 0 : i32
    return %c0_i32, %c0_i32_0 : i32, i32
  }
  func.func @transform_4(%arg0: i32) -> (i32, i32) {
    %c0_i32 = arith.constant 0 : i32
    %c0_i32_0 = arith.constant 0 : i32
    %c0_i32_1 = arith.constant 0 : i32
    return %c0_i32, %c0_i32_0 : i32, i32
  }
  func.func @transform_5(%arg0: i32) -> (i32, i32) {
    %c0_i32 = arith.constant 0 : i32
    %c0_i32_0 = arith.constant 0 : i32
    %c0_i32_1 = arith.constant 0 : i32
    return %c0_i32, %c0_i32_0 : i32, i32
  }
  func.func @transform_6(%arg0: i32) -> (i32, i32) {
    %c0_i32 = arith.constant 0 : i32
    %c0_i32_0 = arith.constant 0 : i32
    %c0_i32_1 = arith.constant 0 : i32
    return %c0_i32, %c0_i32_0 : i32, i32
  }
  func.func @transform_7(%arg0: i32) -> (i32, i32) {
    %c0_i32 = arith.constant 0 : i32
    %c0_i32_0 = arith.constant 0 : i32
    %c0_i32_1 = arith.constant 0 : i32
    return %c0_i32, %c0_i32_0 : i32, i32
  }
  func.func @transform_8(%arg0: i32) -> (i32, i32, i32) {
    %c0_i32 = arith.constant 0 : i32
    %c0_i32_0 = arith.constant 0 : i32
    %c0_i32_1 = arith.constant 0 : i32
    return %arg0, %c0_i32, %c0_i32_0 : i32, i32, i32
  }
  func.func @transform_9(%arg0: i32) -> (i32, i32, i32, i32) {
    %c0_i32 = arith.constant 0 : i32
    %c0_i32_0 = arith.constant 0 : i32
    %c0_i32_1 = arith.constant 0 : i32
    %c0_i32_2 = arith.constant 0 : i32
    return %arg0, %c0_i32, %c0_i32_0, %c0_i32_1 : i32, i32, i32, i32
  }
}

</mosaic_0001>

<llo_original>
// kernel: tpu_custom_call.1
$region0: #{tpu_custom_call.1}
  #allocation0 [shape = 'u32[]', space=smem, size = 0x4, offset = 0x4, fixed_abs, tag = 'smem constant byte address 0x4 - core index']
  #allocation1 [shape = 'u32[144,128]{1,0:T(1,128)}', space=vmem, size = 0x12000, scoped, tag = 'internal scratch']
  #allocation2 [shape = 'f32[1,8,32]{2,1,0:T(8,128)}', space=vmem, size = 0x1000, scoped, tag = 'scratch operand']
  %s0 = inlined_call_operand.vmem [shape: f32[2,8,32], index: 0, kind: input, shape index: {}]
  %s1 = inlined_call_operand.vmem [shape: f32[2,1,8], index: 1, kind: input, shape index: {}]
  %s2 = inlined_call_operand.vmem [shape: f32[96,32], index: 2, kind: input, shape index: {}]
  %s3 = inlined_call_operand.vmem [shape: f32[1,96], index: 3, kind: input, shape index: {}]
  %s4 = inlined_call_operand.vmem [shape: f32[32,32], index: 4, kind: input, shape index: {}]
  %s5 = inlined_call_operand.vmem [shape: f32[1,32], index: 5, kind: input, shape index: {}]
  %s6 = inlined_call_operand.vmem [shape: f32[1,32], index: 6, kind: input, shape index: {}]
  %s7 = inlined_call_operand.vmem [shape: f32[1,32], index: 7, kind: input, shape index: {}]
  %s8 = inlined_call_operand.hbm [shape: f32[2,8,32], index: 8, kind: output, shape index: {0}]
  %s9 = inlined_call_operand.hbm [shape: f32[2,4,8,8], index: 9, kind: output, shape index: {1}]
  %10 = xla_tuple %s8, %s9
  %s11 = sld [smem:[#allocation0]]
  $region73: #{tpu_custom_call.1} parent=0
    _
  %s13 = ssub.s32 1, %s11
  %s14 = scalar_select 0, %s13, %s11
  $region1: #{tpu_custom_call.1} parent=0
    #allocation3 [shape = 'u8[8192]{0}', space=vmem, size = 0x2000, scoped, tag = 'output window, operand 0']
    #allocation4 [shape = 's32[2]{0}', space=sflag, size = 0x8, scoped, tag = 'scoped memory for tpu_custom_call.1']
    #allocation5 [shape = 'u8[32768]{0}', space=vmem, size = 0x8000, scoped, tag = 'output window, operand 1']
    #allocation6 [shape = 's32[2]{0}', space=sflag, size = 0x8, scoped, tag = 'scoped memory for tpu_custom_call.1']
    %15 = vsyncpa [#allocation4], 0
    %s16 = scalar_lea.sflag [#allocation4], 1
    %17 = vsyncpa %s16, 0
    %18 = vsyncpa [#allocation6], 0
    %s19 = scalar_lea.sflag [#allocation6], 1
    %20 = vsyncpa %s19, 0
    loop: start=0, step=1, limit=4
    $region2: #{tpu_custom_call.1} parent=1 // loop_pre_header
      _
    $region3: #{tpu_custom_call.1} parent=1 // loop_header
      %s22 = sphi 0, %s26
      %p23 = scmp.ge.s32.totalorder %s22, 4
      %s32 = sphi 0, %s34
      %s35 = sphi 0, %s32
      %s36 = sphi 0, %s35
      %s52 = sphi 0, %s36
      %s58 = sphi 0, %s60
      %s61 = sphi 0, %s58
      %s62 = sphi 0, %s61
      %s78 = sphi 0, %s62
      %s82 = sphi 0, %s82
      %s84 = sphi 0, %s82
      %s85 = sphi 0, %s84
      %s99 = sphi 0, %s85
      %s103 = sphi 0, %s103
      %s105 = sphi 0, %s103
      %s106 = sphi 0, %s105
      %s120 = sphi 0, %s106
      %s124 = sphi 0, %s124
      %s126 = sphi 0, %s124
      %s127 = sphi 0, %s126
      %s141 = sphi 0, %s127
      %s145 = sphi 0, %s145
      %s147 = sphi 0, %s145
      %s148 = sphi 0, %s147
      %s162 = sphi 0, %s148
      %s166 = sphi 0, %s166
      %s168 = sphi 0, %s166
      %s169 = sphi 0, %s168
      %s183 = sphi 0, %s169
      %s187 = sphi 0, %s187
      %s189 = sphi 0, %s187
      %s190 = sphi 0, %s189
      %s204 = sphi 0, %s190
      %s210 = sphi 0, %s212
      %s213 = sphi 0, %s210
      %s214 = sphi 0, %s213
      %s230 = sphi 0, %s214
      %s236 = sphi 0, %s238
      %s239 = sphi 0, %s236
      %s240 = sphi 0, %s239
      %s256 = sphi 0, %s240
    $region4: #{tpu_custom_call.1} parent=1 // loop_header_branch
      %25 = sbr.rel (%p23) target = $region8
    $region5: #{tpu_custom_call.1} parent=1 // loop_body
      %s27 = ssub.s32 %s22, 1
      %s28 = ssub.s32 %s22, 2
      %s29 = sadd.s32 %s22, 1
      %s30 = ssub.s32 %s22, %s29
      %p31 = scmp.eq.s32.totalorder %s30, 0
      %s33 = sadd.s32 %s32, 1
      %s34 = scalar_select %p31, %s32, %s33
      %p37 = pneg %p31
      %p38 = scmp.eq.s32.totalorder %s22, 1
      %p39 = por %p37, %p38
      %p40 = scmp.ne.s32.totalorder %s32, %s35
      %p41 = scmp.eq.s32.totalorder %s22, 0
      %p42 = por %p40, %p41
      %p43 = scmp.ne.s32.totalorder %s32, %s35
      %p44 = scmp.eq.s32.totalorder %s27, 1
      %p45 = por %p43, %p44
      %p46 = scmp.ne.s32.totalorder %s35, %s36
      %p47 = scmp.eq.s32.totalorder %s27, 0
      %p48 = por %p46, %p47
      %p49 = scmp.ne.s32.totalorder %s35, %s36
      %p50 = scmp.eq.s32.totalorder %s28, 1
      %p51 = por %p49, %p50
      %p53 = scmp.ne.s32.totalorder %s36, %s52
      %p54 = scmp.eq.s32.totalorder %s28, 0
      %p55 = por %p53, %p54
      %s56 = ssub.s32 %s22, %s29
      %p57 = scmp.eq.s32.totalorder %s56, 0
      %s59 = sadd.s32 %s58, 1
      %s60 = scalar_select %p57, %s58, %s59
      %p63 = pneg %p57
      %p64 = scmp.eq.s32.totalorder %s22, 1
      %p65 = por %p63, %p64
      %p66 = scmp.ne.s32.totalorder %s58, %s61
      %p67 = scmp.eq.s32.totalorder %s22, 0
      %p68 = por %p66, %p67
      %p69 = scmp.ne.s32.totalorder %s58, %s61
      %p70 = scmp.eq.s32.totalorder %s27, 1
      %p71 = por %p69, %p70
      %p72 = scmp.ne.s32.totalorder %s61, %s62
      %p73 = scmp.eq.s32.totalorder %s27, 0
      %p74 = por %p72, %p73
      %p75 = scmp.ne.s32.totalorder %s61, %s62
      %p76 = scmp.eq.s32.totalorder %s28, 1
      %p77 = por %p75, %p76
      %p79 = scmp.ne.s32.totalorder %s62, %s78
      %p80 = scmp.eq.s32.totalorder %s28, 0
      %p81 = por %p79, %p80
      %s83 = sadd.s32 %s82, 1
      %p86 = scmp.eq.s32.totalorder %s22, 1
      %p87 = scmp.ne.s32.totalorder %s82, %s84
      %p88 = scmp.eq.s32.totalorder %s22, 0
      %p89 = por %p87, %p88
      %p90 = scmp.ne.s32.totalorder %s82, %s84
      %p91 = scmp.eq.s32.totalorder %s27, 1
      %p92 = por %p90, %p91
      %p93 = scmp.ne.s32.totalorder %s84, %s85
      %p94 = scmp.eq.s32.totalorder %s27, 0
      %p95 = por %p93, %p94
      %p96 = scmp.ne.s32.totalorder %s84, %s85
      %p97 = scmp.eq.s32.totalorder %s28, 1
      %p98 = por %p96, %p97
      %p100 = scmp.ne.s32.totalorder %s85, %s99
      %p101 = scmp.eq.s32.totalorder %s28, 0
      %p102 = por %p100, %p101
      %s104 = sadd.s32 %s103, 1
      %p107 = scmp.eq.s32.totalorder %s22, 1
      %p108 = scmp.ne.s32.totalorder %s103, %s105
      %p109 = scmp.eq.s32.totalorder %s22, 0
      %p110 = por %p108, %p109
      %p111 = scmp.ne.s32.totalorder %s103, %s105
      %p112 = scmp.eq.s32.totalorder %s27, 1
      %p113 = por %p111, %p112
      %p114 = scmp.ne.s32.totalorder %s105, %s106
      %p115 = scmp.eq.s32.totalorder %s27, 0
      %p116 = por %p114, %p115
      %p117 = scmp.ne.s32.totalorder %s105, %s106
      %p118 = scmp.eq.s32.totalorder %s28, 1
      %p119 = por %p117, %p118
      %p121 = scmp.ne.s32.totalorder %s106, %s120
      %p122 = scmp.eq.s32.totalorder %s28, 0
      %p123 = por %p121, %p122
      %s125 = sadd.s32 %s124, 1
      %p128 = scmp.eq.s32.totalorder %s22, 1
      %p129 = scmp.ne.s32.totalorder %s124, %s126
      %p130 = scmp.eq.s32.totalorder %s22, 0
      %p131 = por %p129, %p130
      %p132 = scmp.ne.s32.totalorder %s124, %s126
      %p133 = scmp.eq.s32.totalorder %s27, 1
      %p134 = por %p132, %p133
      %p135 = scmp.ne.s32.totalorder %s126, %s127
      %p136 = scmp.eq.s32.totalorder %s27, 0
      %p137 = por %p135, %p136
      %p138 = scmp.ne.s32.totalorder %s126, %s127
      %p139 = scmp.eq.s32.totalorder %s28, 1
      %p140 = por %p138, %p139
      %p142 = scmp.ne.s32.totalorder %s127, %s141
      %p143 = scmp.eq.s32.totalorder %s28, 0
      %p144 = por %p142, %p143
      %s146 = sadd.s32 %s145, 1
      %p149 = scmp.eq.s32.totalorder %s22, 1
      %p150 = scmp.ne.s32.totalorder %s145, %s147
      %p151 = scmp.eq.s32.totalorder %s22, 0
      %p152 = por %p150, %p151
      %p153 = scmp.ne.s32.totalorder %s145, %s147
      %p154 = scmp.eq.s32.totalorder %s27, 1
      %p155 = por %p153, %p154
      %p156 = scmp.ne.s32.totalorder %s147, %s148
      %p157 = scmp.eq.s32.totalorder %s27, 0
      %p158 = por %p156, %p157
      %p159 = scmp.ne.s32.totalorder %s147, %s148
      %p160 = scmp.eq.s32.totalorder %s28, 1
      %p161 = por %p159, %p160
      %p163 = scmp.ne.s32.totalorder %s148, %s162
      %p164 = scmp.eq.s32.totalorder %s28, 0
      %p165 = por %p163, %p164
      %s167 = sadd.s32 %s166, 1
      %p170 = scmp.eq.s32.totalorder %s22, 1
      %p171 = scmp.ne.s32.totalorder %s166, %s168
      %p172 = scmp.eq.s32.totalorder %s22, 0
      %p173 = por %p171, %p172
      %p174 = scmp.ne.s32.totalorder %s166, %s168
      %p175 = scmp.eq.s32.totalorder %s27, 1
      %p176 = por %p174, %p175
      %p177 = scmp.ne.s32.totalorder %s168, %s169
      %p178 = scmp.eq.s32.totalorder %s27, 0
      %p179 = por %p177, %p178
      %p180 = scmp.ne.s32.totalorder %s168, %s169
      %p181 = scmp.eq.s32.totalorder %s28, 1
      %p182 = por %p180, %p181
      %p184 = scmp.ne.s32.totalorder %s169, %s183
      %p185 = scmp.eq.s32.totalorder %s28, 0
      %p186 = por %p184, %p185
      %s188 = sadd.s32 %s187, 1
      %p191 = scmp.eq.s32.totalorder %s22, 1
      %p192 = scmp.ne.s32.totalorder %s187, %s189
      %p193 = scmp.eq.s32.totalorder %s22, 0
      %p194 = por %p192, %p193
      %p195 = scmp.ne.s32.totalorder %s187, %s189
      %p196 = scmp.eq.s32.totalorder %s27, 1
      %p197 = por %p195, %p196
      %p198 = scmp.ne.s32.totalorder %s189, %s190
      %p199 = scmp.eq.s32.totalorder %s27, 0
      %p200 = por %p198, %p199
      %p201 = scmp.ne.s32.totalorder %s189, %s190
      %p202 = scmp.eq.s32.totalorder %s28, 1
      %p203 = por %p201, %p202
      %p205 = scmp.ne.s32.totalorder %s190, %s204
      %p206 = scmp.eq.s32.totalorder %s28, 0
      %p207 = por %p205, %p206
      %s208 = ssub.s32 %s22, %s29
      %p209 = scmp.eq.s32.totalorder %s208, 0
      %s211 = sadd.s32 %s210, 1
      %s212 = scalar_select %p209, %s210, %s211
      %p215 = pneg %p209
      %p216 = scmp.eq.s32.totalorder %s22, 1
      %p217 = por %p215, %p216
      %p218 = scmp.ne.s32.totalorder %s210, %s213
      %p219 = scmp.eq.s32.totalorder %s22, 0
      %p220 = por %p218, %p219
      %p221 = scmp.ne.s32.totalorder %s210, %s213
      %p222 = scmp.eq.s32.totalorder %s27, 1
      %p223 = por %p221, %p222
      %p224 = scmp.ne.s32.totalorder %s213, %s214
      %p225 = scmp.eq.s32.totalorder %s27, 0
      %p226 = por %p224, %p225
      %p227 = scmp.ne.s32.totalorder %s213, %s214
      %p228 = scmp.eq.s32.totalorder %s28, 1
      %p229 = por %p227, %p228
      %p231 = scmp.ne.s32.totalorder %s214, %s230
      %p232 = scmp.eq.s32.totalorder %s28, 0
      %p233 = por %p231, %p232
      %s234 = ssub.s32 %s22, %s29
      %p235 = scmp.eq.s32.totalorder %s234, 0
      %s237 = sadd.s32 %s236, 1
      %s238 = scalar_select %p235, %s236, %s237
      %p241 = pneg %p235
      %p242 = scmp.eq.s32.totalorder %s22, 1
      %p243 = por %p241, %p242
      %p244 = scmp.ne.s32.totalorder %s236, %s239
      %p245 = scmp.eq.s32.totalorder %s22, 0
      %p246 = por %p244, %p245
      %p247 = scmp.ne.s32.totalorder %s236, %s239
      %p248 = scmp.eq.s32.totalorder %s27, 1
      %p249 = por %p247, %p248
      %p250 = scmp.ne.s32.totalorder %s239, %s240
      %p251 = scmp.eq.s32.totalorder %s27, 0
      %p252 = por %p250, %p251
      %p253 = scmp.ne.s32.totalorder %s239, %s240
      %p254 = scmp.eq.s32.totalorder %s28, 1
      %p255 = por %p253, %p254
      %p257 = scmp.ne.s32.totalorder %s240, %s256
      %p258 = scmp.eq.s32.totalorder %s28, 0
      %p259 = por %p257, %p258
      %p260 = scmp.le.s32.totalorder 1, %s22
      %p261 = scmp.lt.s32.totalorder %s22, 3
      %p262 = pnand %p260, %p261
      %p263 = pneg %p262
      // Predicated region
      $region9: #{tpu_custom_call.1} parent=5 // pred_check
        _
      $region10: #{tpu_custom_call.1} parent=5 // pred_check_branch
        %265 = sbr.rel (%p262) target = $region12
      $region11: #{tpu_custom_call.1} parent=5 // pred_region
        %s266 = ssub.s32 %s22, 1
        // Predicated region
        $region13: #{tpu_custom_call.1} parent=11 // pred_check
          %p267 = pneg %p95
        $region14: #{tpu_custom_call.1} parent=11 // pred_check_branch
          %269 = sbr.rel (%p267) target = $region16
        $region15: #{tpu_custom_call.1} parent=11 // pred_region
          _
        $region16: #{tpu_custom_call.1} parent=11 // pred_fallthru
          _
        // Predicated region
        $region17: #{tpu_custom_call.1} parent=11 // pred_check
          %p270 = pneg %p116
        $region18: #{tpu_custom_call.1} parent=11 // pred_check_branch
          %272 = sbr.rel (%p270) target = $region20
        $region19: #{tpu_custom_call.1} parent=11 // pred_region
          _
        $region20: #{tpu_custom_call.1} parent=11 // pred_fallthru
          _
        // Predicated region
        $region21: #{tpu_custom_call.1} parent=11 // pred_check
          %p273 = pneg %p137
        $region22: #{tpu_custom_call.1} parent=11 // pred_check_branch
          %275 = sbr.rel (%p273) target = $region24
        $region23: #{tpu_custom_call.1} parent=11 // pred_region
          _
        $region24: #{tpu_custom_call.1} parent=11 // pred_fallthru
          _
        // Predicated region
        $region25: #{tpu_custom_call.1} parent=11 // pred_check
          %p276 = pneg %p158
        $region26: #{tpu_custom_call.1} parent=11 // pred_check_branch
          %278 = sbr.rel (%p276) target = $region28
        $region27: #{tpu_custom_call.1} parent=11 // pred_region
          _
        $region28: #{tpu_custom_call.1} parent=11 // pred_fallthru
          _
        // Predicated region
        $region29: #{tpu_custom_call.1} parent=11 // pred_check
          %p279 = pneg %p179
        $region30: #{tpu_custom_call.1} parent=11 // pred_check_branch
          %281 = sbr.rel (%p279) target = $region32
        $region31: #{tpu_custom_call.1} parent=11 // pred_region
          _
        $region32: #{tpu_custom_call.1} parent=11 // pred_fallthru
          _
        // Predicated region
        $region33: #{tpu_custom_call.1} parent=11 // pred_check
          %p282 = pneg %p200
        $region34: #{tpu_custom_call.1} parent=11 // pred_check_branch
          %284 = sbr.rel (%p282) target = $region36
        $region35: #{tpu_custom_call.1} parent=11 // pred_region
          _
        $region36: #{tpu_custom_call.1} parent=11 // pred_fallthru
          _
      $region12: #{tpu_custom_call.1} parent=5 // pred_fallthru
        _
      %p285 = scmp.lt.s32.totalorder %s22, 2
      // Predicated region
      $region37: #{tpu_custom_call.1} parent=5 // pred_check
        %p286 = pneg %p285
      $region38: #{tpu_custom_call.1} parent=5 // pred_check_branch
        %288 = sbr.rel (%p286) target = $region40
      $region39: #{tpu_custom_call.1} parent=5 // pred_region
        // Predicated region
        $region41: #{tpu_custom_call.1} parent=39 // pred_check
          %p289 = pneg %p42
        $region42: #{tpu_custom_call.1} parent=39 // pred_check_branch
          %291 = sbr.rel (%p289) target = $region44
        $region43: #{tpu_custom_call.1} parent=39 // pred_region
          %p292 = scmp.lt.s32.totalorder %s22, 1
          %s293 = scalar_select %p292, %s22, 1
          %s294 = smul.addr %s293, 8
          %s295 = scalar_lea.vmem %s0, %s294
        $region44: #{tpu_custom_call.1} parent=39 // pred_fallthru
          _
        // Predicated region
        $region45: #{tpu_custom_call.1} parent=39 // pred_check
          %p296 = pneg %p68
        $region46: #{tpu_custom_call.1} parent=39 // pred_check_branch
          %298 = sbr.rel (%p296) target = $region48
        $region47: #{tpu_custom_call.1} parent=39 // pred_region
          %p299 = scmp.lt.s32.totalorder %s22, 1
          %s300 = scalar_select %p299, %s22, 1
          %s301 = scalar_lea.vmem %s1, %s300
        $region48: #{tpu_custom_call.1} parent=39 // pred_fallthru
          _
      $region40: #{tpu_custom_call.1} parent=5 // pred_fallthru
        _
      %p302 = scmp.le.s32.totalorder 1, %s22
      %p303 = scmp.lt.s32.totalorder %s22, 3
      %p304 = pnand %p302, %p303
      %p305 = pneg %p304
      // Predicated region
      $region49: #{tpu_custom_call.1} parent=5 // pred_check
        _
      $region50: #{tpu_custom_call.1} parent=5 // pred_check_branch
        %307 = sbr.rel (%p304) target = $region52
      $region51: #{tpu_custom_call.1} parent=5 // pred_region
        %s308 = ssub.s32 %s22, 1
        %p309 = scmp.lt.s32.totalorder %s27, 1
        %s310 = scalar_select %p309, %s27, 1
        %s311 = smul.addr %s310, 8
        %s312 = scalar_lea.vmem %s0, %s311
        %p313 = pneg %p48
        %p314 = pneg %p45
        %p315 = scmp.lt.s32.totalorder %s27, 1
        %s316 = scalar_select %p315, %s27, 1
        %s317 = scalar_lea.vmem %s1, %s316
        %p318 = pneg %p74
        %p319 = pneg %p71
        %p320 = pneg %p95
        %p321 = pneg %p92
        %p322 = pneg %p116
        %p323 = pneg %p113
        %p324 = pneg %p137
        %p325 = pneg %p134
        %p326 = pneg %p158
        %p327 = pneg %p155
        %p328 = pneg %p179
        %p329 = pneg %p176
        %p330 = pneg %p200
        %p331 = pneg %p197
        %p332 = pneg %p226
        %p333 = pneg %p223
        %s334 = sand.u32 %s213, 1
        %s335 = scalar_lea.sflag [#allocation4], %s334
        %s336 = sand.u32 %s213, 1
        %s337 = smul.addr %s336, 8
        %s338 = scalar_lea.vmem [#allocation3], %s337
        %p339 = pneg %p252
        %p340 = pneg %p249
        %s341 = sand.u32 %s239, 1
        %s342 = scalar_lea.sflag [#allocation6], %s341
        %s343 = sand.u32 %s239, 1
        %s344 = smul.addr %s343, 32
        %s345 = scalar_lea.vmem [#allocation5], %s344
        %p346 = scmp.lt.s32.totalorder %s27, 1
        %s347 = scalar_select %p346, %s27, 1
        %s348 = smul.addr %s347, 8
        %s349 = scalar_lea.vmem %s0, %s348
        %p350 = scmp.lt.s32.totalorder %s27, 1
        %s351 = scalar_select %p350, %s27, 1
        %s352 = scalar_lea.vmem %s1, %s351
        %v353 = vld [vmem:[%s349] sm:$0xff]
        %v354 = vld [vmem:[%s2] sm:$0xff]
        %v355 = vld [vmem:[%s2 + $0x8] sm:$0xff]
        %v356 = vld [vmem:[%s2 + $0x10] sm:$0xff]
        %v357 = vld [vmem:[%s2 + $0x18] sm:$0xff]
        %v358 = vld [vmem:[%s2 + $0x20] sm:$0xff]
        %v359 = vld [vmem:[%s2 + $0x28] sm:$0xff]
        %v360 = vld [vmem:[%s2 + $0x30] sm:$0xff]
        %v361 = vld [vmem:[%s2 + $0x38] sm:$0xff]
        %v362 = vld [vmem:[%s2 + $0x40] sm:$0xff]
        %v363 = vld [vmem:[%s2 + $0x48] sm:$0xff]
        %v364 = vld [vmem:[%s2 + $0x50] sm:$0xff]
        %v365 = vld [vmem:[%s2 + $0x58] sm:$0xff]
        %v366 = vld [vmem:[%s3] sm:$0x1]
        %v368 = vlaneseq
        %v369 = vshrl.u32 %v368, 7
        %v370 = vsub.s32 0, %v369
        %v371 = vrot.slane %v366, %v370
        %vm373 = vcmask 261120
        %v375 = vsel %vm373, %v353, 0
        %v378 = vsel %vm373, %v354, 0
        %v381 = vsel %vm373, %v355, 0
        %v384 = vsel %vm373, %v356, 0
        %v387 = vsel %vm373, %v357, 0
        %v390 = vsel %vm373, %v358, 0
        %v393 = vsel %vm373, %v359, 0
        %v396 = vsel %vm373, %v360, 0
        %v399 = vsel %vm373, %v361, 0
        %v402 = vsel %vm373, %v362, 0
        %v405 = vsel %vm373, %v363, 0
        %v408 = vsel %vm373, %v364, 0
        %v411 = vsel %vm373, %v365, 0
        %413 = vmatprep.subr.mxu0 0.0
        %414 = vmatpush1.xpose.msra.mxu0 %v378
        %415 = vmatprep.subr.mxu0 0.0
        %416 = vmatpush1.xpose.msra.mxu0 %v381
        %417 = vmatprep.subr.mxu0 0.0
        %418 = vmatpush1.xpose.msra.mxu0 %v384
        %419 = vmatprep.subr.mxu0 0.0
        %420 = vmatpush1.xpose.msra.mxu0 %v387
        %421 = vmatprep.subr.mxu0 0.0
        %422 = vmatpush1.xpose.msra.mxu0 %v390
        %423 = vmatprep.subr.mxu0 0.0
        %424 = vmatpush1.xpose.msra.mxu0 %v393
        %425 = vmatprep.subr.mxu0 0.0
        %426 = vmatpush1.xpose.msra.mxu0 %v396
        %427 = vmatprep.subr.mxu0 0.0
        %428 = vmatpush1.xpose.msra.mxu0 %v399
        %429 = vmatprep.subr.mxu0 0.0
        %430 = vmatpush1.xpose.msra.mxu0 %v402
        %431 = vmatprep.subr.mxu0 0.0
        %432 = vmatpush1.xpose.msra.mxu0 %v405
        %433 = vmatprep.subr.mxu0 0.0
        %434 = vmatpush1.xpose.msra.mxu0 %v408
        %435 = vmatprep.subr.mxu0 0.0
        %436 = vmatpush1.xpose.msra.mxu0 %v411
        %437 = vmatprep.subr.mxu0 0.0
        %438 = vmatpush1.xpose.msra.mxu0 0.0
        %439 = vmatprep.subr.mxu0 0.0
        %440 = vmatpush1.xpose.msra.mxu0 0.0
        %441 = vmatprep.subr.mxu0 0.0
        %442 = vmatpush1.xpose.msra.mxu0 0.0
        %443 = vmatprep.subr.mxu0 0.0
        %444 = vmatpush1.xpose.msra.mxu0 0.0
        %445 = vmatprep.subr.mxu0 0.0
        %446 = vmatpush1.xpose.msra.mxu0 0.0
        %447 = vmatprep.subr.mxu0 0.0
        %448 = vmatpush1.xpose.msra.mxu0 0.0
        %449 = vmatprep.subr.mxu0 0.0
        %450 = vmatpush1.xpose.msra.mxu0 0.0
        %451 = vmatprep.subr.mxu0 0.0
        %452 = vmatpush1.xpose.msra.mxu0 0.0
        %453 = vmatprep.subr.mxu0 0.0
        %454 = vmatpush1.xpose.msra.mxu0 0.0
        %455 = vmatprep.subr.mxu0 0.0
        %456 = vmatpush1.xpose.msra.mxu0 0.0
        %457 = vmatprep.subr.mxu0 0.0
        %458 = vmatpush1.xpose.msra.mxu0 0.0
        %459 = vmatprep.subr.mxu0 0.0
        %460 = vmatpush1.xpose.msra.mxu0 0.0
        %461 = vmatprep.subr.mxu0 0.0
        %462 = vmatpush1.xpose.msra.mxu0 0.0
        %463 = vmatprep.subr.mxu0 0.0
        %464 = vmatpush1.xpose.msra.mxu0 0.0
        %465 = vmatprep.subr.mxu0 0.0
        %466 = vmatpush1.xpose.msra.mxu0 0.0
        %467 = vmatprep.subr.mxu0 0.0
        %468 = vmatpush1.xpose.msra.mxu0 0.0
        %469 = vmatprep.subr.mxu0 0.0
        %470 = vmatpush1.xpose.msra.mxu0 0.0
        %471 = vmatprep.subr.mxu0 0.0
        %472 = vmatpush1.xpose.msra.mxu0 0.0
        %473 = vmatprep.subr.mxu0 0.0
        %474 = vmatpush1.xpose.msra.mxu0 0.0
        %475 = vmatprep.subr.mxu0 0.0
        %476 = vmatpush1.xpose.msra.mxu0 0.0
        %477 = vmatprep.mubr.f32.mxu0 0.0
        %478 = vmatmul.mubr.f32.gmra.mrb[0].mxu0 %v375
        %v479 = vpop.f32.mrb[0].mxu0
        %v480 = vadd.f32 %v371, %v479
        %v481 = vpop.f32.mrb[0].mxu0
        %482 = vdwg.mxu0
        %v483 = vmul.f32 %v480, 0.35355338
        %v484 = vld [vmem:[%s352] sm:$0x1]
        %v486 = vlaneseq
        %v487 = vshrl.u32 %v486, 7
        %v488 = vsub.s32 0, %v487
        %v489 = vrot.slane %v484, %v488
        %492 = vrot.lane.b32.xlu0 %v480, 96
        %v493 = vpop.permute.xlu0 %492
        %vm494 = vcmask 64512
        %v496 = vsel %vm494, %v483, 0
        %v498 = vsel %vm494, %v493, 0
        %500 = vmatprep.subr.mxu0 0.0
        %501 = vmatpush1.xpose.msra.mxu0 %v498
        %502 = vmatprep.subr.mxu0 0.0
        %503 = vmatpush1.xpose.msra.mxu0 0.0
        %504 = vmatprep.subr.mxu0 0.0
        %505 = vmatpush1.xpose.msra.mxu0 0.0
        %506 = vmatprep.subr.mxu0 0.0
        %507 = vmatpush1.xpose.msra.mxu0 0.0
        %508 = vmatprep.subr.mxu0 0.0
        %509 = vmatpush1.xpose.msra.mxu0 0.0
        %510 = vmatprep.subr.mxu0 0.0
        %511 = vmatpush1.xpose.msra.mxu0 0.0
        %512 = vmatprep.subr.mxu0 0.0
        %513 = vmatpush1.xpose.msra.mxu0 0.0
        %514 = vmatprep.subr.mxu0 0.0
        %515 = vmatpush1.xpose.msra.mxu0 0.0
        %516 = vmatprep.subr.mxu0 0.0
        %517 = vmatpush1.xpose.msra.mxu0 0.0
        %518 = vmatprep.subr.mxu0 0.0
        %519 = vmatpush1.xpose.msra.mxu0 0.0
        %520 = vmatprep.subr.mxu0 0.0
        %521 = vmatpush1.xpose.msra.mxu0 0.0
        %522 = vmatprep.subr.mxu0 0.0
        %523 = vmatpush1.xpose.msra.mxu0 0.0
        %524 = vmatprep.subr.mxu0 0.0
        %525 = vmatpush1.xpose.msra.mxu0 0.0
        %526 = vmatprep.subr.mxu0 0.0
        %527 = vmatpush1.xpose.msra.mxu0 0.0
        %528 = vmatprep.subr.mxu0 0.0
        %529 = vmatpush1.xpose.msra.mxu0 0.0
        %530 = vmatprep.subr.mxu0 0.0
        %531 = vmatpush1.xpose.msra.mxu0 0.0
        %532 = vmatprep.subr.mxu0 0.0
        %533 = vmatpush1.xpose.msra.mxu0 0.0
        %534 = vmatprep.subr.mxu0 0.0
        %535 = vmatpush1.xpose.msra.mxu0 0.0
        %536 = vmatprep.subr.mxu0 0.0
        %537 = vmatpush1.xpose.msra.mxu0 0.0
        %538 = vmatprep.subr.mxu0 0.0
        %539 = vmatpush1.xpose.msra.mxu0 0.0
        %540 = vmatprep.subr.mxu0 0.0
        %541 = vmatpush1.xpose.msra.mxu0 0.0
        %542 = vmatprep.subr.mxu0 0.0
        %543 = vmatpush1.xpose.msra.mxu0 0.0
        %544 = vmatprep.subr.mxu0 0.0
        %545 = vmatpush1.xpose.msra.mxu0 0.0
        %546 = vmatprep.subr.mxu0 0.0
        %547 = vmatpush1.xpose.msra.mxu0 0.0
        %548 = vmatprep.subr.mxu0 0.0
        %549 = vmatpush1.xpose.msra.mxu0 0.0
        %550 = vmatprep.subr.mxu0 0.0
        %551 = vmatpush1.xpose.msra.mxu0 0.0
        %552 = vmatprep.subr.mxu0 0.0
        %553 = vmatpush1.xpose.msra.mxu0 0.0
        %554 = vmatprep.subr.mxu0 0.0
        %555 = vmatpush1.xpose.msra.mxu0 0.0
        %556 = vmatprep.subr.mxu0 0.0
        %557 = vmatpush1.xpose.msra.mxu0 0.0
        %558 = vmatprep.subr.mxu0 0.0
        %559 = vmatpush1.xpose.msra.mxu0 0.0
        %560 = vmatprep.subr.mxu0 0.0
        %561 = vmatpush1.xpose.msra.mxu0 0.0
        %562 = vmatprep.subr.mxu0 0.0
        %563 = vmatpush1.xpose.msra.mxu0 0.0
        %564 = vmatprep.mubr.f32.mxu0 0.0
        %565 = vmatmul.mubr.f32.gmra.mrb[0].mxu0 %v496
        %v566 = vpop.f32.mrb[0].mxu0
        %v567 = vadd.f32 %v489, %v566
        %v568 = vpop.f32.mrb[0].mxu0
        %569 = vdwg.mxu0
        %v570 = vsel %vm494, %v567, -inf
        %571 = vmax.xlane.f32.xlu0 %v570
        %v572 = vpop.xlane.xlu0 %571
        %v573 = vsub.f32 %v567, %v572
        %v574 = vmul.f32 %v573, 1.442695
        %v575 = vpow.pop %v574
        %v576 = vsel %vm494, %v575, 0.0
        %577 = vadd.xlane.f32.xlu0 %v576
        %v578 = vpop.xlane.xlu0 %577
        %v579 = vrcp.pop %v578
        %v580 = vmul.f32 %v575, %v579
        %581 = vst.msk [vmem:[%s345] sm:$0xff] %vm494, %v580
        %582 = vrot.lane.b32.xlu0 %v480, 64
        %v583 = vpop.permute.xlu0 %582
        %v586 = vsel %vm494, %v580, 0
        %588 = vmatprep.subr.mxu0 0.0
        %589 = vmatpush1.msra.mxu0 %v583
        %590 = vmatprep.subr.mxu0 0.0
        %591 = vmatpush1.msra.mxu0 0.0
        %592 = vmatprep.subr.mxu0 0.0
        %593 = vmatpush1.msra.mxu0 0.0
        %594 = vmatprep.subr.mxu0 0.0
        %595 = vmatpush1.msra.mxu0 0.0
        %596 = vmatprep.subr.mxu0 0.0
        %597 = vmatpush1.msra.mxu0 0.0
        %598 = vmatprep.subr.mxu0 0.0
        %599 = vmatpush1.msra.mxu0 0.0
        %600 = vmatprep.subr.mxu0 0.0
        %601 = vmatpush1.msra.mxu0 0.0
        %602 = vmatprep.subr.mxu0 0.0
        %603 = vmatpush1.msra.mxu0 0.0
        %604 = vmatprep.subr.mxu0 0.0
        %605 = vmatpush1.msra.mxu0 0.0
        %606 = vmatprep.subr.mxu0 0.0
        %607 = vmatpush1.msra.mxu0 0.0
        %608 = vmatprep.subr.mxu0 0.0
        %609 = vmatpush1.msra.mxu0 0.0
        %610 = vmatprep.subr.mxu0 0.0
        %611 = vmatpush1.msra.mxu0 0.0
        %612 = vmatprep.subr.mxu0 0.0
        %613 = vmatpush1.msra.mxu0 0.0
        %614 = vmatprep.subr.mxu0 0.0
        %615 = vmatpush1.msra.mxu0 0.0
        %616 = vmatprep.subr.mxu0 0.0
        %617 = vmatpush1.msra.mxu0 0.0
        %618 = vmatprep.subr.mxu0 0.0
        %619 = vmatpush1.msra.mxu0 0.0
        %620 = vmatprep.subr.mxu0 0.0
        %621 = vmatpush1.msra.mxu0 0.0
        %622 = vmatprep.subr.mxu0 0.0
        %623 = vmatpush1.msra.mxu0 0.0
        %624 = vmatprep.subr.mxu0 0.0
        %625 = vmatpush1.msra.mxu0 0.0
        %626 = vmatprep.subr.mxu0 0.0
        %627 = vmatpush1.msra.mxu0 0.0
        %628 = vmatprep.subr.mxu0 0.0
        %629 = vmatpush1.msra.mxu0 0.0
        %630 = vmatprep.subr.mxu0 0.0
        %631 = vmatpush1.msra.mxu0 0.0
        %632 = vmatprep.subr.mxu0 0.0
        %633 = vmatpush1.msra.mxu0 0.0
        %634 = vmatprep.subr.mxu0 0.0
        %635 = vmatpush1.msra.mxu0 0.0
        %636 = vmatprep.subr.mxu0 0.0
        %637 = vmatpush1.msra.mxu0 0.0
        %638 = vmatprep.subr.mxu0 0.0
        %639 = vmatpush1.msra.mxu0 0.0
        %640 = vmatprep.subr.mxu0 0.0
        %641 = vmatpush1.msra.mxu0 0.0
        %642 = vmatprep.subr.mxu0 0.0
        %643 = vmatpush1.msra.mxu0 0.0
        %644 = vmatprep.subr.mxu0 0.0
        %645 = vmatpush1.msra.mxu0 0.0
        %646 = vmatprep.subr.mxu0 0.0
        %647 = vmatpush1.msra.mxu0 0.0
        %648 = vmatprep.subr.mxu0 0.0
        %649 = vmatpush1.msra.mxu0 0.0
        %650 = vmatprep.subr.mxu0 0.0
        %651 = vmatpush1.msra.mxu0 0.0
        %652 = vmatprep.mubr.f32.mxu0 0.0
        %653 = vmatmul.mubr.f32.gmra.mrb[0].mxu0 %v586
        %v654 = vpop.f32.mrb[0].mxu0
        %v655 = vadd.f32 0.0, %v654
        %v656 = vpop.f32.mrb[0].mxu0
        %657 = vdwg.mxu0
        %658 = vst.msk [vmem:[#allocation2] sm:$0xff] %vm494, %v655
        %659 = vrot.lane.b32.xlu0 %v483, 120
        %v660 = vpop.permute.xlu0 %659
        %661 = vrot.lane.b32.xlu0 %v480, 88
        %v662 = vpop.permute.xlu0 %661
        %v663 = vsel %vm494, %v660, 0
        %v665 = vsel %vm494, %v662, 0
        %667 = vmatprep.subr.mxu0 0.0
        %668 = vmatpush1.xpose.msra.mxu0 %v665
        %669 = vmatprep.subr.mxu0 0.0
        %670 = vmatpush1.xpose.msra.mxu0 0.0
        %671 = vmatprep.subr.mxu0 0.0
        %672 = vmatpush1.xpose.msra.mxu0 0.0
        %673 = vmatprep.subr.mxu0 0.0
        %674 = vmatpush1.xpose.msra.mxu0 0.0
        %675 = vmatprep.subr.mxu0 0.0
        %676 = vmatpush1.xpose.msra.mxu0 0.0
        %677 = vmatprep.subr.mxu0 0.0
        %678 = vmatpush1.xpose.msra.mxu0 0.0
        %679 = vmatprep.subr.mxu0 0.0
        %680 = vmatpush1.xpose.msra.mxu0 0.0
        %681 = vmatprep.subr.mxu0 0.0
        %682 = vmatpush1.xpose.msra.mxu0 0.0
        %683 = vmatprep.subr.mxu0 0.0
        %684 = vmatpush1.xpose.msra.mxu0 0.0
        %685 = vmatprep.subr.mxu0 0.0
        %686 = vmatpush1.xpose.msra.mxu0 0.0
        %687 = vmatprep.subr.mxu0 0.0
        %688 = vmatpush1.xpose.msra.mxu0 0.0
        %689 = vmatprep.subr.mxu0 0.0
        %690 = vmatpush1.xpose.msra.mxu0 0.0
        %691 = vmatprep.subr.mxu0 0.0
        %692 = vmatpush1.xpose.msra.mxu0 0.0
        %693 = vmatprep.subr.mxu0 0.0
        %694 = vmatpush1.xpose.msra.mxu0 0.0
        %695 = vmatprep.subr.mxu0 0.0
        %696 = vmatpush1.xpose.msra.mxu0 0.0
        %697 = vmatprep.subr.mxu0 0.0
        %698 = vmatpush1.xpose.msra.mxu0 0.0
        %699 = vmatprep.subr.mxu0 0.0
        %700 = vmatpush1.xpose.msra.mxu0 0.0
        %701 = vmatprep.subr.mxu0 0.0
        %702 = vmatpush1.xpose.msra.mxu0 0.0
        %703 = vmatprep.subr.mxu0 0.0
        %704 = vmatpush1.xpose.msra.mxu0 0.0
        %705 = vmatprep.subr.mxu0 0.0
        %706 = vmatpush1.xpose.msra.mxu0 0.0
        %707 = vmatprep.subr.mxu0 0.0
        %708 = vmatpush1.xpose.msra.mxu0 0.0
        %709 = vmatprep.subr.mxu0 0.0
        %710 = vmatpush1.xpose.msra.mxu0 0.0
        %711 = vmatprep.subr.mxu0 0.0
        %712 = vmatpush1.xpose.msra.mxu0 0.0
        %713 = vmatprep.subr.mxu0 0.0
        %714 = vmatpush1.xpose.msra.mxu0 0.0
        %715 = vmatprep.subr.mxu0 0.0
        %716 = vmatpush1.xpose.msra.mxu0 0.0
        %717 = vmatprep.subr.mxu0 0.0
        %718 = vmatpush1.xpose.msra.mxu0 0.0
        %719 = vmatprep.subr.mxu0 0.0
        %720 = vmatpush1.xpose.msra.mxu0 0.0
        %721 = vmatprep.subr.mxu0 0.0
        %722 = vmatpush1.xpose.msra.mxu0 0.0
        %723 = vmatprep.subr.mxu0 0.0
        %724 = vmatpush1.xpose.msra.mxu0 0.0
        %725 = vmatprep.subr.mxu0 0.0
        %726 = vmatpush1.xpose.msra.mxu0 0.0
        %727 = vmatprep.subr.mxu0 0.0
        %728 = vmatpush1.xpose.msra.mxu0 0.0
        %729 = vmatprep.subr.mxu0 0.0
        %730 = vmatpush1.xpose.msra.mxu0 0.0
        %731 = vmatprep.mubr.f32.mxu0 0.0
        %732 = vmatmul.mubr.f32.gmra.mrb[0].mxu0 %v663
        %v733 = vpop.f32.mrb[0].mxu0
        %v734 = vadd.f32 %v489, %v733
        %v735 = vpop.f32.mrb[0].mxu0
        %736 = vdwg.mxu0
        %v737 = vsel %vm494, %v734, -inf
        %738 = vmax.xlane.f32.xlu0 %v737
        %v739 = vpop.xlane.xlu0 %738
        %v740 = vsub.f32 %v734, %v739
        %v741 = vmul.f32 %v740, 1.442695
        %v742 = vpow.pop %v741
        %v743 = vsel %vm494, %v742, 0.0
        %744 = vadd.xlane.f32.xlu0 %v743
        %v745 = vpop.xlane.xlu0 %744
        %v746 = vrcp.pop %v745
        %v747 = vmul.f32 %v742, %v746
        %s748 = scalar_lea.vmem %s345, 8 [#allocation5]
        %749 = vst.msk [vmem:[%s748] sm:$0xff] %vm494, %v747
        %750 = vrot.lane.b32.xlu0 %v480, 56
        %v751 = vpop.permute.xlu0 %750
        %v754 = vsel %vm494, %v747, 0
        %756 = vmatprep.subr.mxu0 0.0
        %757 = vmatpush1.msra.mxu0 %v751
        %758 = vmatprep.subr.mxu0 0.0
        %759 = vmatpush1.msra.mxu0 0.0
        %760 = vmatprep.subr.mxu0 0.0
        %761 = vmatpush1.msra.mxu0 0.0
        %762 = vmatprep.subr.mxu0 0.0
        %763 = vmatpush1.msra.mxu0 0.0
        %764 = vmatprep.subr.mxu0 0.0
        %765 = vmatpush1.msra.mxu0 0.0
        %766 = vmatprep.subr.mxu0 0.0
        %767 = vmatpush1.msra.mxu0 0.0
        %768 = vmatprep.subr.mxu0 0.0
        %769 = vmatpush1.msra.mxu0 0.0
        %770 = vmatprep.subr.mxu0 0.0
        %771 = vmatpush1.msra.mxu0 0.0
        %772 = vmatprep.subr.mxu0 0.0
        %773 = vmatpush1.msra.mxu0 0.0
        %774 = vmatprep.subr.mxu0 0.0
        %775 = vmatpush1.msra.mxu0 0.0
        %776 = vmatprep.subr.mxu0 0.0
        %777 = vmatpush1.msra.mxu0 0.0
        %778 = vmatprep.subr.mxu0 0.0
        %779 = vmatpush1.msra.mxu0 0.0
        %780 = vmatprep.subr.mxu0 0.0
        %781 = vmatpush1.msra.mxu0 0.0
        %782 = vmatprep.subr.mxu0 0.0
        %783 = vmatpush1.msra.mxu0 0.0
        %784 = vmatprep.subr.mxu0 0.0
        %785 = vmatpush1.msra.mxu0 0.0
        %786 = vmatprep.subr.mxu0 0.0
        %787 = vmatpush1.msra.mxu0 0.0
        %788 = vmatprep.subr.mxu0 0.0
        %789 = vmatpush1.msra.mxu0 0.0
        %790 = vmatprep.subr.mxu0 0.0
        %791 = vmatpush1.msra.mxu0 0.0
        %792 = vmatprep.subr.mxu0 0.0
        %793 = vmatpush1.msra.mxu0 0.0
        %794 = vmatprep.subr.mxu0 0.0
        %795 = vmatpush1.msra.mxu0 0.0
        %796 = vmatprep.subr.mxu0 0.0
        %797 = vmatpush1.msra.mxu0 0.0
        %798 = vmatprep.subr.mxu0 0.0
        %799 = vmatpush1.msra.mxu0 0.0
        %800 = vmatprep.subr.mxu0 0.0
        %801 = vmatpush1.msra.mxu0 0.0
        %802 = vmatprep.subr.mxu0 0.0
        %803 = vmatpush1.msra.mxu0 0.0
        %804 = vmatprep.subr.mxu0 0.0
        %805 = vmatpush1.msra.mxu0 0.0
        %806 = vmatprep.subr.mxu0 0.0
        %807 = vmatpush1.msra.mxu0 0.0
        %808 = vmatprep.subr.mxu0 0.0
        %809 = vmatpush1.msra.mxu0 0.0
        %810 = vmatprep.subr.mxu0 0.0
        %811 = vmatpush1.msra.mxu0 0.0
        %812 = vmatprep.subr.mxu0 0.0
        %813 = vmatpush1.msra.mxu0 0.0
        %814 = vmatprep.subr.mxu0 0.0
        %815 = vmatpush1.msra.mxu0 0.0
        %816 = vmatprep.subr.mxu0 0.0
        %817 = vmatpush1.msra.mxu0 0.0
        %818 = vmatprep.subr.mxu0 0.0
        %819 = vmatpush1.msra.mxu0 0.0
        %820 = vmatprep.mubr.f32.mxu0 0.0
        %821 = vmatmul.mubr.f32.gmra.mrb[0].mxu0 %v754
        %v822 = vpop.f32.mrb[0].mxu0
        %v823 = vadd.f32 0.0, %v822
        %v824 = vpop.f32.mrb[0].mxu0
        %825 = vdwg.mxu0
        %827 = vrot.lane.b32.xlu0 %v823, 8
        %v828 = vpop.permute.xlu0 %827
        %vm830 = vcmask 130112
        %831 = vst.msk [vmem:[#allocation2] sm:$0xff] %vm830, %v828
        %832 = vrot.lane.b32.xlu0 %v483, 112
        %v833 = vpop.permute.xlu0 %832
        %834 = vrot.lane.b32.xlu0 %v480, 80
        %v835 = vpop.permute.xlu0 %834
        %v836 = vsel %vm494, %v833, 0
        %v838 = vsel %vm494, %v835, 0
        %840 = vmatprep.subr.mxu0 0.0
        %841 = vmatpush1.xpose.msra.mxu0 %v838
        %842 = vmatprep.subr.mxu0 0.0
        %843 = vmatpush1.xpose.msra.mxu0 0.0
        %844 = vmatprep.subr.mxu0 0.0
        %845 = vmatpush1.xpose.msra.mxu0 0.0
        %846 = vmatprep.subr.mxu0 0.0
        %847 = vmatpush1.xpose.msra.mxu0 0.0
        %848 = vmatprep.subr.mxu0 0.0
        %849 = vmatpush1.xpose.msra.mxu0 0.0
        %850 = vmatprep.subr.mxu0 0.0
        %851 = vmatpush1.xpose.msra.mxu0 0.0
        %852 = vmatprep.subr.mxu0 0.0
        %853 = vmatpush1.xpose.msra.mxu0 0.0
        %854 = vmatprep.subr.mxu0 0.0
        %855 = vmatpush1.xpose.msra.mxu0 0.0
        %856 = vmatprep.subr.mxu0 0.0
        %857 = vmatpush1.xpose.msra.mxu0 0.0
        %858 = vmatprep.subr.mxu0 0.0
        %859 = vmatpush1.xpose.msra.mxu0 0.0
        %860 = vmatprep.subr.mxu0 0.0
        %861 = vmatpush1.xpose.msra.mxu0 0.0
        %862 = vmatprep.subr.mxu0 0.0
        %863 = vmatpush1.xpose.msra.mxu0 0.0
        %864 = vmatprep.subr.mxu0 0.0
        %865 = vmatpush1.xpose.msra.mxu0 0.0
        %866 = vmatprep.subr.mxu0 0.0
        %867 = vmatpush1.xpose.msra.mxu0 0.0
        %868 = vmatprep.subr.mxu0 0.0
        %869 = vmatpush1.xpose.msra.mxu0 0.0
        %870 = vmatprep.subr.mxu0 0.0
        %871 = vmatpush1.xpose.msra.mxu0 0.0
        %872 = vmatprep.subr.mxu0 0.0
        %873 = vmatpush1.xpose.msra.mxu0 0.0
        %874 = vmatprep.subr.mxu0 0.0
        %875 = vmatpush1.xpose.msra.mxu0 0.0
        %876 = vmatprep.subr.mxu0 0.0
        %877 = vmatpush1.xpose.msra.mxu0 0.0
        %878 = vmatprep.subr.mxu0 0.0
        %879 = vmatpush1.xpose.msra.mxu0 0.0
        %880 = vmatprep.subr.mxu0 0.0
        %881 = vmatpush1.xpose.msra.mxu0 0.0
        %882 = vmatprep.subr.mxu0 0.0
        %883 = vmatpush1.xpose.msra.mxu0 0.0
        %884 = vmatprep.subr.mxu0 0.0
        %885 = vmatpush1.xpose.msra.mxu0 0.0
        %886 = vmatprep.subr.mxu0 0.0
        %887 = vmatpush1.xpose.msra.mxu0 0.0
        %888 = vmatprep.subr.mxu0 0.0
        %889 = vmatpush1.xpose.msra.mxu0 0.0
        %890 = vmatprep.subr.mxu0 0.0
        %891 = vmatpush1.xpose.msra.mxu0 0.0
        %892 = vmatprep.subr.mxu0 0.0
        %893 = vmatpush1.xpose.msra.mxu0 0.0
        %894 = vmatprep.subr.mxu0 0.0
        %895 = vmatpush1.xpose.msra.mxu0 0.0
        %896 = vmatprep.subr.mxu0 0.0
        %897 = vmatpush1.xpose.msra.mxu0 0.0
        %898 = vmatprep.subr.mxu0 0.0
        %899 = vmatpush1.xpose.msra.mxu0 0.0
        %900 = vmatprep.subr.mxu0 0.0
        %901 = vmatpush1.xpose.msra.mxu0 0.0
        %902 = vmatprep.subr.mxu0 0.0
        %903 = vmatpush1.xpose.msra.mxu0 0.0
        %904 = vmatprep.mubr.f32.mxu0 0.0
        %905 = vmatmul.mubr.f32.gmra.mrb[0].mxu0 %v836
        %v906 = vpop.f32.mrb[0].mxu0
        %v907 = vadd.f32 %v489, %v906
        %v908 = vpop.f32.mrb[0].mxu0
        %909 = vdwg.mxu0
        %v910 = vsel %vm494, %v907, -inf
        %911 = vmax.xlane.f32.xlu0 %v910
        %v912 = vpop.xlane.xlu0 %911
        %v913 = vsub.f32 %v907, %v912
        %v914 = vmul.f32 %v913, 1.442695
        %v915 = vpow.pop %v914
        %v916 = vsel %vm494, %v915, 0.0
        %917 = vadd.xlane.f32.xlu0 %v916
        %v918 = vpop.xlane.xlu0 %917
        %v919 = vrcp.pop %v918
        %v920 = vmul.f32 %v915, %v919
        %s921 = scalar_lea.vmem %s345, 16 [#allocation5]
        %922 = vst.msk [vmem:[%s921] sm:$0xff] %vm494, %v920
        %923 = vrot.lane.b32.xlu0 %v480, 48
        %v924 = vpop.permute.xlu0 %923
        %v927 = vsel %vm494, %v920, 0
        %929 = vmatprep.subr.mxu0 0.0
        %930 = vmatpush1.msra.mxu0 %v924
        %931 = vmatprep.subr.mxu0 0.0
        %932 = vmatpush1.msra.mxu0 0.0
        %933 = vmatprep.subr.mxu0 0.0
        %934 = vmatpush1.msra.mxu0 0.0
        %935 = vmatprep.subr.mxu0 0.0
        %936 = vmatpush1.msra.mxu0 0.0
        %937 = vmatprep.subr.mxu0 0.0
        %938 = vmatpush1.msra.mxu0 0.0
        %939 = vmatprep.subr.mxu0 0.0
        %940 = vmatpush1.msra.mxu0 0.0
        %941 = vmatprep.subr.mxu0 0.0
        %942 = vmatpush1.msra.mxu0 0.0
        %943 = vmatprep.subr.mxu0 0.0
        %944 = vmatpush1.msra.mxu0 0.0
        %945 = vmatprep.subr.mxu0 0.0
        %946 = vmatpush1.msra.mxu0 0.0
        %947 = vmatprep.subr.mxu0 0.0
        %948 = vmatpush1.msra.mxu0 0.0
        %949 = vmatprep.subr.mxu0 0.0
        %950 = vmatpush1.msra.mxu0 0.0
        %951 = vmatprep.subr.mxu0 0.0
        %952 = vmatpush1.msra.mxu0 0.0
        %953 = vmatprep.subr.mxu0 0.0
        %954 = vmatpush1.msra.mxu0 0.0
        %955 = vmatprep.subr.mxu0 0.0
        %956 = vmatpush1.msra.mxu0 0.0
        %957 = vmatprep.subr.mxu0 0.0
        %958 = vmatpush1.msra.mxu0 0.0
        %959 = vmatprep.subr.mxu0 0.0
        %960 = vmatpush1.msra.mxu0 0.0
        %961 = vmatprep.subr.mxu0 0.0
        %962 = vmatpush1.msra.mxu0 0.0
        %963 = vmatprep.subr.mxu0 0.0
        %964 = vmatpush1.msra.mxu0 0.0
        %965 = vmatprep.subr.mxu0 0.0
        %966 = vmatpush1.msra.mxu0 0.0
        %967 = vmatprep.subr.mxu0 0.0
        %968 = vmatpush1.msra.mxu0 0.0
        %969 = vmatprep.subr.mxu0 0.0
        %970 = vmatpush1.msra.mxu0 0.0
        %971 = vmatprep.subr.mxu0 0.0
        %972 = vmatpush1.msra.mxu0 0.0
        %973 = vmatprep.subr.mxu0 0.0
        %974 = vmatpush1.msra.mxu0 0.0
        %975 = vmatprep.subr.mxu0 0.0
        %976 = vmatpush1.msra.mxu0 0.0
        %977 = vmatprep.subr.mxu0 0.0
        %978 = vmatpush1.msra.mxu0 0.0
        %979 = vmatprep.subr.mxu0 0.0
        %980 = vmatpush1.msra.mxu0 0.0
        %981 = vmatprep.subr.mxu0 0.0
        %982 = vmatpush1.msra.mxu0 0.0
        %983 = vmatprep.subr.mxu0 0.0
        %984 = vmatpush1.msra.mxu0 0.0
        %985 = vmatprep.subr.mxu0 0.0
        %986 = vmatpush1.msra.mxu0 0.0
        %987 = vmatprep.subr.mxu0 0.0
        %988 = vmatpush1.msra.mxu0 0.0
        %989 = vmatprep.subr.mxu0 0.0
        %990 = vmatpush1.msra.mxu0 0.0
        %991 = vmatprep.subr.mxu0 0.0
        %992 = vmatpush1.msra.mxu0 0.0
        %993 = vmatprep.mubr.f32.mxu0 0.0
        %994 = vmatmul.mubr.f32.gmra.mrb[0].mxu0 %v927
        %v995 = vpop.f32.mrb[0].mxu0
        %v996 = vadd.f32 0.0, %v995
        %v997 = vpop.f32.mrb[0].mxu0
        %998 = vdwg.mxu0
        %1000 = vrot.lane.b32.xlu0 %v996, 16
        %v1001 = vpop.permute.xlu0 %1000
        %vm1003 = vcmask 195712
        %1004 = vst.msk [vmem:[#allocation2] sm:$0xff] %vm1003, %v1001
        %1005 = vrot.lane.b32.xlu0 %v483, 104
        %v1006 = vpop.permute.xlu0 %1005
        %1007 = vrot.lane.b32.xlu0 %v480, 72
        %v1008 = vpop.permute.xlu0 %1007
        %v1009 = vsel %vm494, %v1006, 0
        %v1011 = vsel %vm494, %v1008, 0
        %1013 = vmatprep.subr.mxu0 0.0
        %1014 = vmatpush1.xpose.msra.mxu0 %v1011
        %1015 = vmatprep.subr.mxu0 0.0
        %1016 = vmatpush1.xpose.msra.mxu0 0.0
        %1017 = vmatprep.subr.mxu0 0.0
        %1018 = vmatpush1.xpose.msra.mxu0 0.0
        %1019 = vmatprep.subr.mxu0 0.0
        %1020 = vmatpush1.xpose.msra.mxu0 0.0
        %1021 = vmatprep.subr.mxu0 0.0
        %1022 = vmatpush1.xpose.msra.mxu0 0.0
        %1023 = vmatprep.subr.mxu0 0.0
        %1024 = vmatpush1.xpose.msra.mxu0 0.0
        %1025 = vmatprep.subr.mxu0 0.0
        %1026 = vmatpush1.xpose.msra.mxu0 0.0
        %1027 = vmatprep.subr.mxu0 0.0
        %1028 = vmatpush1.xpose.msra.mxu0 0.0
        %1029 = vmatprep.subr.mxu0 0.0
        %1030 = vmatpush1.xpose.msra.mxu0 0.0
        %1031 = vmatprep.subr.mxu0 0.0
        %1032 = vmatpush1.xpose.msra.mxu0 0.0
        %1033 = vmatprep.subr.mxu0 0.0
        %1034 = vmatpush1.xpose.msra.mxu0 0.0
        %1035 = vmatprep.subr.mxu0 0.0
        %1036 = vmatpush1.xpose.msra.mxu0 0.0
        %1037 = vmatprep.subr.mxu0 0.0
        %1038 = vmatpush1.xpose.msra.mxu0 0.0
        %1039 = vmatprep.subr.mxu0 0.0
        %1040 = vmatpush1.xpose.msra.mxu0 0.0
        %1041 = vmatprep.subr.mxu0 0.0
        %1042 = vmatpush1.xpose.msra.mxu0 0.0
        %1043 = vmatprep.subr.mxu0 0.0
        %1044 = vmatpush1.xpose.msra.mxu0 0.0
        %1045 = vmatprep.subr.mxu0 0.0
        %1046 = vmatpush1.xpose.msra.mxu0 0.0
        %1047 = vmatprep.subr.mxu0 0.0
        %1048 = vmatpush1.xpose.msra.mxu0 0.0
        %1049 = vmatprep.subr.mxu0 0.0
        %1050 = vmatpush1.xpose.msra.mxu0 0.0
        %1051 = vmatprep.subr.mxu0 0.0
        %1052 = vmatpush1.xpose.msra.mxu0 0.0
        %1053 = vmatprep.subr.mxu0 0.0
        %1054 = vmatpush1.xpose.msra.mxu0 0.0
        %1055 = vmatprep.subr.mxu0 0.0
        %1056 = vmatpush1.xpose.msra.mxu0 0.0
        %1057 = vmatprep.subr.mxu0 0.0
        %1058 = vmatpush1.xpose.msra.mxu0 0.0
        %1059 = vmatprep.subr.mxu0 0.0
        %1060 = vmatpush1.xpose.msra.mxu0 0.0
        %1061 = vmatprep.subr.mxu0 0.0
        %1062 = vmatpush1.xpose.msra.mxu0 0.0
        %1063 = vmatprep.subr.mxu0 0.0
        %1064 = vmatpush1.xpose.msra.mxu0 0.0
        %1065 = vmatprep.subr.mxu0 0.0
        %1066 = vmatpush1.xpose.msra.mxu0 0.0
        %1067 = vmatprep.subr.mxu0 0.0
        %1068 = vmatpush1.xpose.msra.mxu0 0.0
        %1069 = vmatprep.subr.mxu0 0.0
        %1070 = vmatpush1.xpose.msra.mxu0 0.0
        %1071 = vmatprep.subr.mxu0 0.0
        %1072 = vmatpush1.xpose.msra.mxu0 0.0
        %1073 = vmatprep.subr.mxu0 0.0
        %1074 = vmatpush1.xpose.msra.mxu0 0.0
        %1075 = vmatprep.subr.mxu0 0.0
        %1076 = vmatpush1.xpose.msra.mxu0 0.0
        %1077 = vmatprep.mubr.f32.mxu0 0.0
        %1078 = vmatmul.mubr.f32.gmra.mrb[0].mxu0 %v1009
        %v1079 = vpop.f32.mrb[0].mxu0
        %v1080 = vadd.f32 %v489, %v1079
        %v1081 = vpop.f32.mrb[0].mxu0
        %1082 = vdwg.mxu0
        %v1083 = vsel %vm494, %v1080, -inf
        %1084 = vmax.xlane.f32.xlu0 %v1083
        %v1085 = vpop.xlane.xlu0 %1084
        %v1086 = vsub.f32 %v1080, %v1085
        %v1087 = vmul.f32 %v1086, 1.442695
        %v1088 = vpow.pop %v1087
        %v1089 = vsel %vm494, %v1088, 0.0
        %1090 = vadd.xlane.f32.xlu0 %v1089
        %v1091 = vpop.xlane.xlu0 %1090
        %v1092 = vrcp.pop %v1091
        %v1093 = vmul.f32 %v1088, %v1092
        %s1094 = scalar_lea.vmem %s345, 24 [#allocation5]
        %1095 = vst.msk [vmem:[%s1094] sm:$0xff] %vm494, %v1093
        %1096 = vrot.lane.b32.xlu0 %v480, 40
        %v1097 = vpop.permute.xlu0 %1096
        %v1100 = vsel %vm494, %v1093, 0
        %1102 = vmatprep.subr.mxu0 0.0
        %1103 = vmatpush1.msra.mxu0 %v1097
        %1104 = vmatprep.subr.mxu0 0.0
        %1105 = vmatpush1.msra.mxu0 0.0
        %1106 = vmatprep.subr.mxu0 0.0
        %1107 = vmatpush1.msra.mxu0 0.0
        %1108 = vmatprep.subr.mxu0 0.0
        %1109 = vmatpush1.msra.mxu0 0.0
        %1110 = vmatprep.subr.mxu0 0.0
        %1111 = vmatpush1.msra.mxu0 0.0
        %1112 = vmatprep.subr.mxu0 0.0
        %1113 = vmatpush1.msra.mxu0 0.0
        %1114 = vmatprep.subr.mxu0 0.0
        %1115 = vmatpush1.msra.mxu0 0.0
        %1116 = vmatprep.subr.mxu0 0.0
        %1117 = vmatpush1.msra.mxu0 0.0
        %1118 = vmatprep.subr.mxu0 0.0
        %1119 = vmatpush1.msra.mxu0 0.0
        %1120 = vmatprep.subr.mxu0 0.0
        %1121 = vmatpush1.msra.mxu0 0.0
        %1122 = vmatprep.subr.mxu0 0.0
        %1123 = vmatpush1.msra.mxu0 0.0
        %1124 = vmatprep.subr.mxu0 0.0
        %1125 = vmatpush1.msra.mxu0 0.0
        %1126 = vmatprep.subr.mxu0 0.0
        %1127 = vmatpush1.msra.mxu0 0.0
        %1128 = vmatprep.subr.mxu0 0.0
        %1129 = vmatpush1.msra.mxu0 0.0
        %1130 = vmatprep.subr.mxu0 0.0
        %1131 = vmatpush1.msra.mxu0 0.0
        %1132 = vmatprep.subr.mxu0 0.0
        %1133 = vmatpush1.msra.mxu0 0.0
        %1134 = vmatprep.subr.mxu0 0.0
        %1135 = vmatpush1.msra.mxu0 0.0
        %1136 = vmatprep.subr.mxu0 0.0
        %1137 = vmatpush1.msra.mxu0 0.0
        %1138 = vmatprep.subr.mxu0 0.0
        %1139 = vmatpush1.msra.mxu0 0.0
        %1140 = vmatprep.subr.mxu0 0.0
        %1141 = vmatpush1.msra.mxu0 0.0
        %1142 = vmatprep.subr.mxu0 0.0
        %1143 = vmatpush1.msra.mxu0 0.0
        %1144 = vmatprep.subr.mxu0 0.0
        %1145 = vmatpush1.msra.mxu0 0.0
        %1146 = vmatprep.subr.mxu0 0.0
        %1147 = vmatpush1.msra.mxu0 0.0
        %1148 = vmatprep.subr.mxu0 0.0
        %1149 = vmatpush1.msra.mxu0 0.0
        %1150 = vmatprep.subr.mxu0 0.0
        %1151 = vmatpush1.msra.mxu0 0.0
        %1152 = vmatprep.subr.mxu0 0.0
        %1153 = vmatpush1.msra.mxu0 0.0
        %1154 = vmatprep.subr.mxu0 0.0
        %1155 = vmatpush1.msra.mxu0 0.0
        %1156 = vmatprep.subr.mxu0 0.0
        %1157 = vmatpush1.msra.mxu0 0.0
        %1158 = vmatprep.subr.mxu0 0.0
        %1159 = vmatpush1.msra.mxu0 0.0
        %1160 = vmatprep.subr.mxu0 0.0
        %1161 = vmatpush1.msra.mxu0 0.0
        %1162 = vmatprep.subr.mxu0 0.0
        %1163 = vmatpush1.msra.mxu0 0.0
        %1164 = vmatprep.subr.mxu0 0.0
        %1165 = vmatpush1.msra.mxu0 0.0
        %1166 = vmatprep.mubr.f32.mxu0 0.0
        %1167 = vmatmul.mubr.f32.gmra.mrb[0].mxu0 %v1100
        %v1168 = vpop.f32.mrb[0].mxu0
        %v1169 = vadd.f32 0.0, %v1168
        %v1170 = vpop.f32.mrb[0].mxu0
        %1171 = vdwg.mxu0
        %1173 = vrot.lane.b32.xlu0 %v1169, 24
        %v1174 = vpop.permute.xlu0 %1173
        %vm1176 = vcmask 261312
        %1177 = vst.msk [vmem:[#allocation2] sm:$0xff] %vm1176, %v1174
        %v1178 = vld [vmem:[#allocation2] sm:$0xff]
        %v1179 = vld [vmem:[%s4] sm:$0xff]
        %v1180 = vld [vmem:[%s4 + $0x8] sm:$0xff]
        %v1181 = vld [vmem:[%s4 + $0x10] sm:$0xff]
        %v1182 = vld [vmem:[%s4 + $0x18] sm:$0xff]
        %v1183 = vld [vmem:[%s5] sm:$0x1]
        %v1185 = vlaneseq
        %v1186 = vshrl.u32 %v1185, 7
        %v1187 = vsub.s32 0, %v1186
        %v1188 = vrot.slane %v1183, %v1187
        %v1191 = vsel %vm373, %v1178, 0
        %v1194 = vsel %vm373, %v1179, 0
        %v1197 = vsel %vm373, %v1180, 0
        %v1200 = vsel %vm373, %v1181, 0
        %v1203 = vsel %vm373, %v1182, 0
        %1205 = vmatprep.subr.mxu0 0.0
        %1206 = vmatpush1.xpose.msra.mxu0 %v1194
        %1207 = vmatprep.subr.mxu0 0.0
        %1208 = vmatpush1.xpose.msra.mxu0 %v1197
        %1209 = vmatprep.subr.mxu0 0.0
        %1210 = vmatpush1.xpose.msra.mxu0 %v1200
        %1211 = vmatprep.subr.mxu0 0.0
        %1212 = vmatpush1.xpose.msra.mxu0 %v1203
        %1213 = vmatprep.subr.mxu0 0.0
        %1214 = vmatpush1.xpose.msra.mxu0 0.0
        %1215 = vmatprep.subr.mxu0 0.0
        %1216 = vmatpush1.xpose.msra.mxu0 0.0
        %1217 = vmatprep.subr.mxu0 0.0
        %1218 = vmatpush1.xpose.msra.mxu0 0.0
        %1219 = vmatprep.subr.mxu0 0.0
        %1220 = vmatpush1.xpose.msra.mxu0 0.0
        %1221 = vmatprep.subr.mxu0 0.0
        %1222 = vmatpush1.xpose.msra.mxu0 0.0
        %1223 = vmatprep.subr.mxu0 0.0
        %1224 = vmatpush1.xpose.msra.mxu0 0.0
        %1225 = vmatprep.subr.mxu0 0.0
        %1226 = vmatpush1.xpose.msra.mxu0 0.0
        %1227 = vmatprep.subr.mxu0 0.0
        %1228 = vmatpush1.xpose.msra.mxu0 0.0
        %1229 = vmatprep.subr.mxu0 0.0
        %1230 = vmatpush1.xpose.msra.mxu0 0.0
        %1231 = vmatprep.subr.mxu0 0.0
        %1232 = vmatpush1.xpose.msra.mxu0 0.0
        %1233 = vmatprep.subr.mxu0 0.0
        %1234 = vmatpush1.xpose.msra.mxu0 0.0
        %1235 = vmatprep.subr.mxu0 0.0
        %1236 = vmatpush1.xpose.msra.mxu0 0.0
        %1237 = vmatprep.subr.mxu0 0.0
        %1238 = vmatpush1.xpose.msra.mxu0 0.0
        %1239 = vmatprep.subr.mxu0 0.0
        %1240 = vmatpush1.xpose.msra.mxu0 0.0
        %1241 = vmatprep.subr.mxu0 0.0
        %1242 = vmatpush1.xpose.msra.mxu0 0.0
        %1243 = vmatprep.subr.mxu0 0.0
        %1244 = vmatpush1.xpose.msra.mxu0 0.0
        %1245 = vmatprep.subr.mxu0 0.0
        %1246 = vmatpush1.xpose.msra.mxu0 0.0
        %1247 = vmatprep.subr.mxu0 0.0
        %1248 = vmatpush1.xpose.msra.mxu0 0.0
        %1249 = vmatprep.subr.mxu0 0.0
        %1250 = vmatpush1.xpose.msra.mxu0 0.0
        %1251 = vmatprep.subr.mxu0 0.0
        %1252 = vmatpush1.xpose.msra.mxu0 0.0
        %1253 = vmatprep.subr.mxu0 0.0
        %1254 = vmatpush1.xpose.msra.mxu0 0.0
        %1255 = vmatprep.subr.mxu0 0.0
        %1256 = vmatpush1.xpose.msra.mxu0 0.0
        %1257 = vmatprep.subr.mxu0 0.0
        %1258 = vmatpush1.xpose.msra.mxu0 0.0
        %1259 = vmatprep.subr.mxu0 0.0
        %1260 = vmatpush1.xpose.msra.mxu0 0.0
        %1261 = vmatprep.subr.mxu0 0.0
        %1262 = vmatpush1.xpose.msra.mxu0 0.0
        %1263 = vmatprep.subr.mxu0 0.0
        %1264 = vmatpush1.xpose.msra.mxu0 0.0
        %1265 = vmatprep.subr.mxu0 0.0
        %1266 = vmatpush1.xpose.msra.mxu0 0.0
        %1267 = vmatprep.subr.mxu0 0.0
        %1268 = vmatpush1.xpose.msra.mxu0 0.0
        %1269 = vmatprep.mubr.f32.mxu0 0.0
        %1270 = vmatmul.mubr.f32.gmra.mrb[0].mxu0 %v1191
        %v1271 = vpop.f32.mrb[0].mxu0
        %v1272 = vadd.f32 %v1188, %v1271
        %v1273 = vpop.f32.mrb[0].mxu0
        %1274 = vdwg.mxu0
        %v1275 = vadd.f32 %v1272, %v353
        %v1276 = vsel %vm373, %v1275, 0.0
        %1277 = vadd.xlane.f32.xlu0 %v1276
        %v1278 = vpop.xlane.xlu0 %1277
        %v1279 = vrcp.pop 32.0
        %v1280 = vmul.f32 %v1278, %v1279
        %v1281 = vsub.f32 %v1275, %v1280
        %v1282 = vmul.f32 %v1281, %v1281
        %v1283 = vsel %vm373, %v1282, 0.0
        %1284 = vadd.xlane.f32.xlu0 %v1283
        %v1285 = vpop.xlane.xlu0 %1284
        %v1286 = vmul.f32 %v1285, %v1279
        %v1287 = vadd.f32 %v1286, 1e-12
        %v1288 = vrsqrt.pop %v1287
        %v1289 = vmul.f32 %v1281, %v1288
        %v1290 = vld [vmem:[%s6] sm:$0x1]
        %v1292 = vlaneseq
        %v1293 = vshrl.u32 %v1292, 7
        %v1294 = vsub.s32 0, %v1293
        %v1295 = vrot.slane %v1290, %v1294
        %v1297 = vmul.f32 %v1295, %v1289
        %v1298 = vld [vmem:[%s7] sm:$0x1]
        %v1300 = vlaneseq
        %v1301 = vshrl.u32 %v1300, 7
        %v1302 = vsub.s32 0, %v1301
        %v1303 = vrot.slane %v1298, %v1302
        %v1305 = vadd.f32 %v1297, %v1303
        %1306 = vst.msk [vmem:[%s338] sm:$0xff] %vm373, %v1305
        %s1307 = sand.u32 %s213, 1
        %s1308 = scalar_lea.sflag [#allocation4], %s1307
        %s1309 = sand.u32 %s213, 1
        %s1310 = smul.addr %s1309, 8
        %s1311 = scalar_lea.vmem [#allocation3], %s1310
        %s1312 = sand.u32 %s239, 1
        %s1313 = scalar_lea.sflag [#allocation6], %s1312
        %s1314 = sand.u32 %s239, 1
        %s1315 = smul.addr %s1314, 32
        %s1316 = scalar_lea.vmem [#allocation5], %s1315
        // Predicated region
        $region53: #{tpu_custom_call.1} parent=51 // pred_check
          %p1317 = pneg %p223
        $region54: #{tpu_custom_call.1} parent=51 // pred_check_branch
          %1319 = sbr.rel (%p1317) target = $region56
        $region55: #{tpu_custom_call.1} parent=51 // pred_region
          %s1321 = ssub.s32 128, 128
          %1322 = vsyncadd %s1308, %s1321
          %s1323 = smul.addr %s27, 128
          %s1324 = scalar_lea.hbm %s8, %s1323
          %s1326 = sshll.u32 %s1311, 4
          %s1327 = int_to_ptr.vmem [resolvable:$true] %s1326
          %1329 = dma.vmem_to_hbm [thread:$0]  %s1327, 128, %s1324, %s1308
        $region56: #{tpu_custom_call.1} parent=51 // pred_fallthru
          _
        // Predicated region
        $region57: #{tpu_custom_call.1} parent=51 // pred_check
          %p1330 = pneg %p249
        $region58: #{tpu_custom_call.1} parent=51 // pred_check_branch
          %1332 = sbr.rel (%p1330) target = $region60
        $region59: #{tpu_custom_call.1} parent=51 // pred_region
          %s1334 = ssub.s32 512, 512
          %1335 = vsyncadd %s1313, %s1334
          %s1336 = smul.addr %s27, 4
          %s1337 = smul.addr %s1336, 128
          %s1338 = scalar_lea.hbm %s9, %s1337
          %s1339 = sshll.u32 %s1316, 4
          %s1340 = int_to_ptr.vmem [resolvable:$true] %s1339
          %1345 = dma.vmem_to_hbm [thread:$0]  %s1340, 512, %s1338, %s1313, 128, 128, 8
        $region60: #{tpu_custom_call.1} parent=51 // pred_fallthru
          _
      $region52: #{tpu_custom_call.1} parent=5 // pred_fallthru
        _
      %p1346 = scmp.le.s32.totalorder 2, %s22
      // Predicated region
      $region61: #{tpu_custom_call.1} parent=5 // pred_check
        %p1347 = pneg %p1346
      $region62: #{tpu_custom_call.1} parent=5 // pred_check_branch
        %1349 = sbr.rel (%p1347) target = $region64
      $region63: #{tpu_custom_call.1} parent=5 // pred_region
        %s1350 = ssub.s32 %s22, 2
        // Predicated region
        $region65: #{tpu_custom_call.1} parent=63 // pred_check
          %p1351 = pneg %p229
        $region66: #{tpu_custom_call.1} parent=63 // pred_check_branch
          %1353 = sbr.rel (%p1351) target = $region68
        $region67: #{tpu_custom_call.1} parent=63 // pred_region
          %s1354 = sand.u32 %s214, 1
          %s1355 = scalar_lea.sflag [#allocation4], %s1354
          %s1356 = sand.u32 %s214, 1
          %s1357 = smul.addr %s1356, 8
          %s1358 = scalar_lea.vmem [#allocation3], %s1357
          %1359 = dma.done %s1355, 128
        $region68: #{tpu_custom_call.1} parent=63 // pred_fallthru
          _
        // Predicated region
        $region69: #{tpu_custom_call.1} parent=63 // pred_check
          %p1360 = pneg %p255
        $region70: #{tpu_custom_call.1} parent=63 // pred_check_branch
          %1362 = sbr.rel (%p1360) target = $region72
        $region71: #{tpu_custom_call.1} parent=63 // pred_region
          %s1363 = sand.u32 %s240, 1
          %s1364 = scalar_lea.sflag [#allocation6], %s1363
          %s1365 = sand.u32 %s240, 1
          %s1366 = smul.addr %s1365, 32
          %s1367 = scalar_lea.vmem [#allocation5], %s1366
          %1368 = dma.done %s1364, 512
        $region72: #{tpu_custom_call.1} parent=63 // pred_fallthru
          _
      $region64: #{tpu_custom_call.1} parent=5 // pred_fallthru
        _
    $region6: #{tpu_custom_call.1} parent=1 // loop_footer
      %s26 = sadd.s32 1, %s22
    $region7: #{tpu_custom_call.1} parent=1 // loop_footer_branch
      %21 = sbr.rel target = $region3
    $region8: #{tpu_custom_call.1} parent=1 // loop_exit
      _
    %1369 = vsyncpa [#allocation4], 1
    %s1370 = scalar_lea.sflag [#allocation4], 1
    %1371 = vsyncpa %s1370, 1
    %1372 = vsyncpa [#allocation6], 1
    %s1373 = scalar_lea.sflag [#allocation6], 1
    %1374 = vsyncpa %s1373, 1

</llo_original>
